<compile_context>
chip_gen: v7x
topology: tpu7x:2x2x1
jax: 0.10.0
libtpu: 0.0.40
codegen_flags: <defaults>
</compile_context>

<pallas_src>
import functools
import math

import jax
import jax.numpy as jnp
import numpy as np
from jax.experimental import pallas as pl
from jax.experimental.pallas import tpu as pltpu


def _vq_kernel(x_ref, ea_ref, et_ref, q_ref, kl_ref, cnt_ref, xa_ref, iota_ref,
               *, log_m, sw):
    t = pl.program_id(2)
    D = x_ref.shape[2]
    T = x_ref.shape[3]
    M = ea_ref.shape[1]
    n_strips = T // sw

    ea = ea_ref[0]                       # (M, D+1) rows: [2*e_m | -||e_m||^2]
    et = et_ref[0]                       # (D, M)   codebook transposed

    @pl.when(t == 0)
    def _init():
        kl_ref[...] = jnp.zeros_like(kl_ref)
        cnt_ref[...] = jnp.zeros_like(cnt_ref)
        # constants reused by every later step of this (n, b) sequence
        xa_ref[D:D + 1, :] = jnp.ones((1, sw), jnp.float32)
        iota_ref[...] = jax.lax.broadcasted_iota(jnp.int32, (M, sw), 0)

    ones_col = jnp.ones((sw, 1), jnp.float32)   # hoisted out of the strip loop

    def strip(start, carry):
        kl_vec, cnt = carry

        # augmented tokens [x ; 1]:  logits = ea @ xa = 2<e, x> - ||e||^2
        xa_ref[:D, :] = x_ref[0, 0, :, pl.ds(start, sw)].astype(jnp.float32)
        logits = jnp.dot(ea, xa_ref[...],
                         preferred_element_type=jnp.float32)          # (M, sw)

        # softmax statistics over the codebook axis (sublanes)
        lmax = jnp.max(logits, axis=0, keepdims=True)                  # (1, sw)
        z = logits - lmax
        ez = jnp.exp(z)
        se = jnp.sum(ez, axis=0, keepdims=True)                        # (1, sw)
        s_ezz = jnp.sum(ez * z, axis=0, keepdims=True)                 # (1, sw)
        # per-token KL(p || uniform) = sum_m p_m (log p_m + log M)
        kl_vec = kl_vec + (s_ezz / se - jnp.log(se) + log_m)

        # eval path: argmax one-hot (first index wins ties); z == 0 at the max
        iota = iota_ref[...]
        cand = jnp.where(z == 0.0, iota, M)
        idx = jnp.min(cand, axis=0, keepdims=True)                     # (1, sw)
        onehot = (iota == idx).astype(jnp.float32)                     # (M, sw)

        # quantized^T = e^T @ onehot -> (D, sw), lane-dense store
        q_ref[0, 0, :, pl.ds(start, sw)] = jnp.dot(
            et, onehot, preferred_element_type=jnp.float32).astype(q_ref.dtype)

        # code-usage counts on the (mostly idle) MXU, not a cross-lane reduce
        cnt = cnt + jnp.dot(onehot, ones_col,
                            preferred_element_type=jnp.float32)        # (M, 1)
        return kl_vec, cnt

    init = (jnp.zeros((1, sw), jnp.float32), jnp.zeros((M, 1), jnp.float32))
    if n_strips == 1:
        kl_vec, cnt = strip(0, init)
    else:
        kl_vec, cnt = jax.lax.fori_loop(
            0, n_strips,
            lambda s, c: strip(pl.multiple_of(s * sw, sw), c),
            init, unroll=True)

    kl_ref[0, 0] += jnp.sum(kl_vec, keepdims=True)                     # (1, 1)
    cnt_ref[0, 0] += cnt                                               # (M, 1)


def _pick_tile(hw, requested):
    requested = min(requested, hw)
    if hw == requested:
        return hw
    t = (requested // 128) * 128
    while t >= 128:
        if hw % t == 0:
            return t
        t -= 128
    return hw   # fallback: single full-width tile (see TODO above)


def _pick_strip(tile, requested=256):
    if tile <= requested:
        return tile
    if tile % requested == 0:
        return requested
    if tile % 128 == 0:
        return 128
    return tile


def vq_embedding_gs_soft(x, embedding, *, tile=512, strip=256):
    """x: (B, C, H, W) with C = N*D; embedding: (N, M, D).

    Returns (quantized (B, C, H, W), KL scalar, perplexity_sum scalar)."""
    B, C, H, W = x.shape
    N, M, D = embedding.shape
    assert C == N * D
    HW = H * W
    tile = _pick_tile(HW, tile)
    assert HW % tile == 0
    sw = _pick_strip(tile, strip)
    assert tile % sw == 0

    # free reshape (no copy); the (B, N) <-> (N, B) swap lives in the index maps
    x_r = x.reshape(B, N, D, HW)

    emb_f32 = embedding.astype(jnp.float32)
    e2 = jnp.sum(emb_f32 * emb_f32, axis=-1, keepdims=True)            # (N, M, 1)
    e_aug = jnp.concatenate([2.0 * emb_f32, -e2], axis=-1)             # (N, M, D+1)
    e_t = jnp.swapaxes(emb_f32, 1, 2)                                  # (N, D, M)

    kernel = functools.partial(_vq_kernel, log_m=math.log(M), sw=sw)

    q_r, kl_nb, counts = pl.pallas_call(
        kernel,
        out_shape=(
            jax.ShapeDtypeStruct((B, N, D, HW), x.dtype),
            jax.ShapeDtypeStruct((N, B, 1, 1), jnp.float32),
            jax.ShapeDtypeStruct((N, B, M, 1), jnp.float32),
        ),
        grid_spec=pltpu.PrefetchScalarGridSpec(
            num_scalar_prefetch=0,
            grid=(N, B, HW // tile),
            in_specs=[
                pl.BlockSpec((1, 1, D, tile), lambda n, b, t: (b, n, 0, t)),
                pl.BlockSpec((1, M, D + 1), lambda n, b, t: (n, 0, 0)),
                pl.BlockSpec((1, D, M), lambda n, b, t: (n, 0, 0)),
            ],
            out_specs=[
                pl.BlockSpec((1, 1, D, tile), lambda n, b, t: (b, n, 0, t)),
                pl.BlockSpec((1, 1, 1, 1), lambda n, b, t: (n, b, 0, 0)),
                pl.BlockSpec((1, 1, M, 1), lambda n, b, t: (n, b, 0, 0)),
            ],
            scratch_shapes=[
                pltpu.VMEM((D + 1, sw), jnp.float32),   # augmented tokens [x ; 1]
                pltpu.VMEM((M, sw), jnp.int32),         # code-index iota (constant)
            ],
        ),
        compiler_params=pltpu.CompilerParams(
            dimension_semantics=("parallel", "parallel", "arbitrary"),
            vmem_limit_bytes=32 * 1024 * 1024,
        ),
    )(x_r, e_aug, e_t)

    quantized = q_r.reshape(B, C, H, W)                                # free reshape
    KL = jnp.sum(kl_nb) / B
    counts_n = jnp.sum(counts[..., 0], axis=1)                         # (N, M)
    avg_probs = counts_n / (B * HW)
    perplexity = jnp.exp(-jnp.sum(avg_probs * jnp.log(avg_probs + 1e-10), axis=-1))
    return quantized, KL, jnp.sum(perplexity)


def _reference(x, embedding):
    """NumPy float64 reference mirroring the PyTorch eval forward."""
    x = np.asarray(x, dtype=np.float64)
    e = np.asarray(embedding, dtype=np.float64)
    B, C, H, W = x.shape
    N, M, D = e.shape
    L = B * H * W
    x_flat = x.reshape(B, N, D, H, W).transpose(1, 0, 3, 4, 2).reshape(N, L, D)
    dist = (np.sum(e ** 2, axis=2)[:, None, :]
            + np.sum(x_flat ** 2, axis=2, keepdims=True)
            - 2.0 * np.einsum("nld,nmd->nlm", x_flat, e))
    logits = -dist
    z = logits - logits.max(axis=-1, keepdims=True)
    logp = z - np.log(np.sum(np.exp(z), axis=-1, keepdims=True))
    probs = np.exp(logp)
    idx = np.argmax(probs, axis=-1)
    samples = np.eye(M, dtype=np.float64)[idx]                         # (N, L, M)
    quantized = np.einsum("nlm,nmd->nld", samples, e)
    quantized = quantized.reshape(N, B, H, W, D).transpose(1, 0, 4, 2, 3).reshape(B, C, H, W)
    kl = np.where(probs == 0.0, 0.0, probs * (logp + math.log(M)))
    KL = kl.sum() / B
    avg_probs = samples.mean(axis=1)
    perplexity = np.exp(-np.sum(avg_probs * np.log(avg_probs + 1e-10), axis=-1))
    return quantized, KL, perplexity.sum()


if __name__ == "__main__":
    # latent_dim N=2, num_embeddings M=128, embedding_dim D=8
    # => C = N*D = 16, x: (B=2, 16, H=8, W=8)
    N, M, D = 2, 128, 8
    B, H, W = 2, 8, 8
    C = N * D

    key = jax.random.PRNGKey(0)
    kx, ke = jax.random.split(key)
    x = jax.random.normal(kx, (B, C, H, W), dtype=jnp.float32)
    # nn.init.uniform_(embedding, -1/M, 1/M)
    embedding = jax.random.uniform(ke, (N, M, D), dtype=jnp.float32,
                                   minval=-1.0 / M, maxval=1.0 / M)

    q, kl, ppl = jax.block_until_ready(vq_embedding_gs_soft(x, embedding))

    q_ref, kl_ref, ppl_ref = _reference(x, embedding)
    np.testing.assert_allclose(np.asarray(q), q_ref, rtol=1e-5, atol=1e-5)
    np.testing.assert_allclose(float(kl), float(kl_ref), rtol=1e-4, atol=1e-4)
    np.testing.assert_allclose(float(ppl), float(ppl_ref), rtol=1e-4, atol=1e-4)

    print("KERNEL_OK")
</pallas_src>

<mosaic_0001>
module attributes {stable_mosaic.version = 11 : i64} {
  func.func @_vq_kernel(%arg0: i32, %arg1: i32, %arg2: i32, %arg3: memref<1x1x8x64xf32, #tpu.memory_space<vmem>>, %arg4: memref<1x128x9xf32, #tpu.memory_space<vmem>>, %arg5: memref<1x8x128xf32, #tpu.memory_space<vmem>>, %arg6: memref<1x1x8x64xf32, #tpu.memory_space<vmem>>, %arg7: memref<1x1x1x1xf32, #tpu.memory_space<vmem>>, %arg8: memref<1x1x128x1xf32, #tpu.memory_space<vmem>>, %arg9: memref<9x64xf32, #tpu.memory_space<vmem>>, %arg10: memref<128x64xi32, #tpu.memory_space<vmem>>) attributes {dimension_semantics = [#tpu.dimension_semantics<parallel>, #tpu.dimension_semantics<parallel>, #tpu.dimension_semantics<arbitrary>], iteration_bounds = array<i64: 2, 2, 1>, scalar_prefetch = 0 : i64, scratch_operands = 2 : i64, tpu.core_type = #tpu.core_type<tc>, window_params = [{transform_indices = @transform_0, window_bounds = array<i64: 1, 1, 8, 64>}, {transform_indices = @transform_1, window_bounds = array<i64: 1, 128, 9>}, {transform_indices = @transform_2, window_bounds = array<i64: 1, 8, 128>}, {transform_indices = @transform_3, window_bounds = array<i64: 1, 1, 8, 64>}, {transform_indices = @transform_4, window_bounds = array<i64: 1, 1, 1, 1>}, {transform_indices = @transform_5, window_bounds = array<i64: 1, 1, 128, 1>}]} {
    %c0 = arith.constant 0 : index
    %c0_0 = arith.constant 0 : index
    %c0_1 = arith.constant 0 : index
    %0 = vector.load %arg4[%c0, %c0_0, %c0_1] : memref<1x128x9xf32, #tpu.memory_space<vmem>>, vector<1x128x9xf32>
    %1 = vector.shape_cast %0 : vector<1x128x9xf32> to vector<128x9xf32>
    %c0_2 = arith.constant 0 : index
    %c0_3 = arith.constant 0 : index
    %c0_4 = arith.constant 0 : index
    %2 = vector.load %arg5[%c0_2, %c0_3, %c0_4] : memref<1x8x128xf32, #tpu.memory_space<vmem>>, vector<1x8x128xf32>
    %3 = vector.shape_cast %2 : vector<1x8x128xf32> to vector<8x128xf32>
    %c0_i32 = arith.constant 0 : i32
    %4 = arith.cmpi eq, %arg2, %c0_i32 : i32
    %5 = arith.extui %4 : i1 to i32
    %c0_i32_5 = arith.constant 0 : i32
    %6 = arith.cmpi ne, %5, %c0_i32_5 : i32
    scf.if %6 {
      %cst_48 = arith.constant 0.000000e+00 : f32
      %65 = vector.broadcast %cst_48 : f32 to vector<1x1x1x1xf32>
      %c0_49 = arith.constant 0 : index
      %c0_50 = arith.constant 0 : index
      %c0_51 = arith.constant 0 : index
      %c0_52 = arith.constant 0 : index
      %66 = vector.load %arg7[%c0_49, %c0_50, %c0_51, %c0_52] : memref<1x1x1x1xf32, #tpu.memory_space<vmem>>, vector<1x1x1x1xf32>
      tpu.vector_store %arg7[%c0_49, %c0_50, %c0_51, %c0_52], %65 {strides = array<i32>} : memref<1x1x1x1xf32, #tpu.memory_space<vmem>>, vector<1x1x1x1xf32>,
      %cst_53 = arith.constant 0.000000e+00 : f32
      %67 = vector.broadcast %cst_53 : f32 to vector<1x1x128x1xf32>
      %c0_54 = arith.constant 0 : index
      %c0_55 = arith.constant 0 : index
      %c0_56 = arith.constant 0 : index
      %c0_57 = arith.constant 0 : index
      %68 = vector.load %arg8[%c0_54, %c0_55, %c0_56, %c0_57] : memref<1x1x128x1xf32, #tpu.memory_space<vmem>>, vector<1x1x128x1xf32>
      tpu.vector_store %arg8[%c0_54, %c0_55, %c0_56, %c0_57], %67 {strides = array<i32>} : memref<1x1x128x1xf32, #tpu.memory_space<vmem>>, vector<1x1x128x1xf32>,
      %cst_58 = arith.constant 1.000000e+00 : f32
      %69 = vector.broadcast %cst_58 : f32 to vector<1x64xf32>
      %c8 = arith.constant 8 : index
      %c0_59 = arith.constant 0 : index
      %70 = vector.load %arg9[%c8, %c0_59] : memref<9x64xf32, #tpu.memory_space<vmem>>, vector<1x64xf32>
      tpu.vector_store %arg9[%c8, %c0_59], %69 {strides = array<i32>} : memref<9x64xf32, #tpu.memory_space<vmem>>, vector<1x64xf32>,
      %71 = tpu.iota {dimensions = array<i32: 0>} : vector<128x64xi32>
      %c0_60 = arith.constant 0 : index
      %c0_61 = arith.constant 0 : index
      %72 = vector.load %arg10[%c0_60, %c0_61] : memref<128x64xi32, #tpu.memory_space<vmem>>, vector<128x64xi32>
      tpu.vector_store %arg10[%c0_60, %c0_61], %71 {strides = array<i32>} : memref<128x64xi32, #tpu.memory_space<vmem>>, vector<128x64xi32>,
    } else {
    }
    %cst = arith.constant 1.000000e+00 : f32
    %7 = vector.broadcast %cst : f32 to vector<64x1xf32>
    %cst_6 = arith.constant 0.000000e+00 : f32
    %8 = vector.broadcast %cst_6 : f32 to vector<1x64xf32>
    %cst_7 = arith.constant 0.000000e+00 : f32
    %9 = vector.broadcast %cst_7 : f32 to vector<128x1xf32>
    %c0_8 = arith.constant 0 : index
    %c0_9 = arith.constant 0 : index
    %c0_10 = arith.constant 0 : index
    %c0_11 = arith.constant 0 : index
    %10 = vector.load %arg3[%c0_8, %c0_9, %c0_10, %c0_11] : memref<1x1x8x64xf32, #tpu.memory_space<vmem>>, vector<1x1x8x64xf32>
    %11 = vector.shape_cast %10 : vector<1x1x8x64xf32> to vector<8x64xf32>
    %c0_12 = arith.constant 0 : index
    %c0_13 = arith.constant 0 : index
    %12 = vector.load %arg9[%c0_12, %c0_13] : memref<9x64xf32, #tpu.memory_space<vmem>>, vector<8x64xf32>
    tpu.vector_store %arg9[%c0_12, %c0_13], %11 {strides = array<i32>} : memref<9x64xf32, #tpu.memory_space<vmem>>, vector<8x64xf32>,
    %c0_14 = arith.constant 0 : index
    %c0_15 = arith.constant 0 : index
    %13 = vector.load %arg9[%c0_14, %c0_15] : memref<9x64xf32, #tpu.memory_space<vmem>>, vector<9x64xf32>
    %cst_16 = arith.constant dense<0.000000e+00> : vector<128x64xf32>
    %14 = tpu.matmul %1, %13, %cst_16 {dimension_numbers = #tpu.dot_dimension_numbers<[1], [0], [0], [1], [0, 0, 1, 1], [], []>} : vector<128x9xf32>, vector<9x64xf32>, vector<128x64xf32> -> vector<128x64xf32>
    %cst_17 = arith.constant dense<0xFF800000> : vector<64xf32>
    %15 = vector.multi_reduction <maximumf>, %14, %cst_17 [0] : vector<128x64xf32> to vector<64xf32>
    %16 = vector.shape_cast %15 : vector<64xf32> to vector<1x64xf32>
    %17 = vector.broadcast %16 : vector<1x64xf32> to vector<128x64xf32>
    %18 = arith.subf %14, %17 : vector<128x64xf32>
    %19 = math.exp %18 : vector<128x64xf32>
    %cst_18 = arith.constant dense<0.000000e+00> : vector<64xf32>
    %20 = vector.multi_reduction <add>, %19, %cst_18 [0] : vector<128x64xf32> to vector<64xf32>
    %21 = vector.shape_cast %20 : vector<64xf32> to vector<1x64xf32>
    %22 = arith.mulf %19, %18 : vector<128x64xf32>
    %cst_19 = arith.constant dense<0.000000e+00> : vector<64xf32>
    %23 = vector.multi_reduction <add>, %22, %cst_19 [0] : vector<128x64xf32> to vector<64xf32>
    %24 = vector.shape_cast %23 : vector<64xf32> to vector<1x64xf32>
    %25 = arith.divf %24, %21 : vector<1x64xf32>
    %26 = math.log %21 : vector<1x64xf32>
    %27 = arith.subf %25, %26 : vector<1x64xf32>
    %cst_20 = arith.constant 4.85203028 : f32
    %28 = vector.broadcast %cst_20 : f32 to vector<1x64xf32>
    %29 = arith.addf %27, %28 : vector<1x64xf32>
    %30 = arith.addf %8, %29 : vector<1x64xf32>
    %c0_21 = arith.constant 0 : index
    %c0_22 = arith.constant 0 : index
    %31 = vector.load %arg10[%c0_21, %c0_22] : memref<128x64xi32, #tpu.memory_space<vmem>>, vector<128x64xi32>
    %cst_23 = arith.constant 0.000000e+00 : f32
    %32 = vector.broadcast %cst_23 : f32 to vector<128x64xf32>
    %33 = arith.cmpf oeq, %18, %32 : vector<128x64xf32>
    %c128_i32 = arith.constant 128 : i32
    %34 = vector.broadcast %c128_i32 : i32 to vector<128x64xi32>
    %35 = arith.select %33, %31, %34 : vector<128x64xi1>, vector<128x64xi32>
    %cst_24 = arith.constant dense<2147483647> : vector<64xi32>
    %36 = vector.multi_reduction <minsi>, %35, %cst_24 [0] : vector<128x64xi32> to vector<64xi32>
    %37 = vector.shape_cast %36 : vector<64xi32> to vector<1x64xi32>
    %38 = vector.broadcast %37 : vector<1x64xi32> to vector<128x64xi32>
    %39 = arith.cmpi eq, %31, %38 : vector<128x64xi32>
    %40 = arith.extui %39 : vector<128x64xi1> to vector<128x64xi32>
    %41 = arith.sitofp %40 : vector<128x64xi32> to vector<128x64xf32>
    %cst_25 = arith.constant dense<0.000000e+00> : vector<8x64xf32>
    %42 = tpu.matmul %3, %41, %cst_25 {dimension_numbers = #tpu.dot_dimension_numbers<[1], [0], [0], [1], [0, 0, 1, 1], [], []>} : vector<8x128xf32>, vector<128x64xf32>, vector<8x64xf32> -> vector<8x64xf32>
    %c0_26 = arith.constant 0 : index
    %c0_27 = arith.constant 0 : index
    %c0_28 = arith.constant 0 : index
    %c0_29 = arith.constant 0 : index
    %43 = vector.load %arg6[%c0_26, %c0_27, %c0_28, %c0_29] : memref<1x1x8x64xf32, #tpu.memory_space<vmem>>, vector<1x1x8x64xf32>
    %44 = vector.shape_cast %43 : vector<1x1x8x64xf32> to vector<8x64xf32>
    %45 = vector.shape_cast %42 : vector<8x64xf32> to vector<1x1x8x64xf32>
    tpu.vector_store %arg6[%c0_26, %c0_27, %c0_28, %c0_29], %45 {strides = array<i32>} : memref<1x1x8x64xf32, #tpu.memory_space<vmem>>, vector<1x1x8x64xf32>,
    %cst_30 = arith.constant dense<0.000000e+00> : vector<128x1xf32>
    %46 = tpu.matmul %41, %7, %cst_30 {dimension_numbers = #tpu.dot_dimension_numbers<[1], [0], [0], [1], [0, 0, 1, 1], [], []>} : vector<128x64xf32>, vector<64x1xf32>, vector<128x1xf32> -> vector<128x1xf32>
    %47 = arith.addf %9, %46 : vector<128x1xf32>
    %c0_31 = arith.constant 0 : index
    %c0_32 = arith.constant 0 : index
    %c0_33 = arith.constant 0 : index
    %c0_34 = arith.constant 0 : index
    %48 = vector.load %arg7[%c0_31, %c0_32, %c0_33, %c0_34] : memref<1x1x1x1xf32, #tpu.memory_space<vmem>>, vector<1x1x1x1xf32>
    %49 = vector.shape_cast %48 : vector<1x1x1x1xf32> to vector<1x1xf32>
    %50 = vector.shape_cast %30 : vector<1x64xf32> to vector<1x1x64xf32>
    %cst_35 = arith.constant dense<0.000000e+00> : vector<1xf32>
    %51 = vector.multi_reduction <add>, %50, %cst_35 [1, 2] : vector<1x1x64xf32> to vector<1xf32>
    %52 = vector.shape_cast %51 : vector<1xf32> to vector<1x1x1xf32>
    %53 = vector.extract %52[0, 0, 0] : f32 from vector<1x1x1xf32>
    %54 = vector.broadcast %53 : f32 to vector<1x1xf32>
    %55 = arith.addf %49, %54 : vector<1x1xf32>
    %c0_36 = arith.constant 0 : index
    %c0_37 = arith.constant 0 : index
    %c0_38 = arith.constant 0 : index
    %c0_39 = arith.constant 0 : index
    %56 = vector.load %arg7[%c0_36, %c0_37, %c0_38, %c0_39] : memref<1x1x1x1xf32, #tpu.memory_space<vmem>>, vector<1x1x1x1xf32>
    %57 = vector.shape_cast %56 : vector<1x1x1x1xf32> to vector<1x1xf32>
    %58 = vector.shape_cast %55 : vector<1x1xf32> to vector<1x1x1x1xf32>
    tpu.vector_store %arg7[%c0_36, %c0_37, %c0_38, %c0_39], %58 {strides = array<i32>} : memref<1x1x1x1xf32, #tpu.memory_space<vmem>>, vector<1x1x1x1xf32>,
    %c0_40 = arith.constant 0 : index
    %c0_41 = arith.constant 0 : index
    %c0_42 = arith.constant 0 : index
    %c0_43 = arith.constant 0 : index
    %59 = vector.load %arg8[%c0_40, %c0_41, %c0_42, %c0_43] : memref<1x1x128x1xf32, #tpu.memory_space<vmem>>, vector<1x1x128x1xf32>
    %60 = vector.shape_cast %59 : vector<1x1x128x1xf32> to vector<128x1xf32>
    %61 = arith.addf %60, %47 : vector<128x1xf32>
    %c0_44 = arith.constant 0 : index
    %c0_45 = arith.constant 0 : index
    %c0_46 = arith.constant 0 : index
    %c0_47 = arith.constant 0 : index
    %62 = vector.load %arg8[%c0_44, %c0_45, %c0_46, %c0_47] : memref<1x1x128x1xf32, #tpu.memory_space<vmem>>, vector<1x1x128x1xf32>
    %63 = vector.shape_cast %62 : vector<1x1x128x1xf32> to vector<128x1xf32>
    %64 = vector.shape_cast %61 : vector<128x1xf32> to vector<1x1x128x1xf32>
    tpu.vector_store %arg8[%c0_44, %c0_45, %c0_46, %c0_47], %64 {strides = array<i32>} : memref<1x1x128x1xf32, #tpu.memory_space<vmem>>, vector<1x1x128x1xf32>,
    return
  }
  func.func @transform_0(%arg0: i32, %arg1: i32, %arg2: i32) -> (i32, i32, i32, i32) {
    %c0_i32 = arith.constant 0 : i32
    %c0_i32_0 = arith.constant 0 : i32
    return %arg1, %arg0, %c0_i32, %arg2 : i32, i32, i32, i32
  }
  func.func @transform_1(%arg0: i32, %arg1: i32, %arg2: i32) -> (i32, i32, i32) {
    %c0_i32 = arith.constant 0 : i32
    %c0_i32_0 = arith.constant 0 : i32
    %c0_i32_1 = arith.constant 0 : i32
    return %arg0, %c0_i32, %c0_i32_0 : i32, i32, i32
  }
  func.func @transform_2(%arg0: i32, %arg1: i32, %arg2: i32) -> (i32, i32, i32) {
    %c0_i32 = arith.constant 0 : i32
    %c0_i32_0 = arith.constant 0 : i32
    %c0_i32_1 = arith.constant 0 : i32
    return %arg0, %c0_i32, %c0_i32_0 : i32, i32, i32
  }
  func.func @transform_3(%arg0: i32, %arg1: i32, %arg2: i32) -> (i32, i32, i32, i32) {
    %c0_i32 = arith.constant 0 : i32
    %c0_i32_0 = arith.constant 0 : i32
    return %arg1, %arg0, %c0_i32, %arg2 : i32, i32, i32, i32
  }
  func.func @transform_4(%arg0: i32, %arg1: i32, %arg2: i32) -> (i32, i32, i32, i32) {
    %c0_i32 = arith.constant 0 : i32
    %c0_i32_0 = arith.constant 0 : i32
    %c0_i32_1 = arith.constant 0 : i32
    return %arg0, %arg1, %c0_i32, %c0_i32_0 : i32, i32, i32, i32
  }
  func.func @transform_5(%arg0: i32, %arg1: i32, %arg2: i32) -> (i32, i32, i32, i32) {
    %c0_i32 = arith.constant 0 : i32
    %c0_i32_0 = arith.constant 0 : i32
    %c0_i32_1 = arith.constant 0 : i32
    return %arg0, %arg1, %c0_i32, %c0_i32_0 : i32, i32, i32, i32
  }
}

</mosaic_0001>

<llo_original>
// kernel: tpu_custom_call.1
$region0: #{tpu_custom_call.1}
  #allocation0 [shape = 'u32[]', space=smem, size = 0x4, offset = 0x4, fixed_abs, tag = 'smem constant byte address 0x4 - core index']
  #allocation1 [shape = 'u32[144,128]{1,0:T(1,128)}', space=vmem, size = 0x12000, scoped, tag = 'internal scratch']
  #allocation2 [shape = 'f32[9,64]{1,0:T(8,128)}', space=vmem, size = 0x2000, scoped, tag = 'scratch operand']
  #allocation3 [shape = 's32[128,64]{1,0:T(8,128)}', space=vmem, size = 0x10000, scoped, tag = 'scratch operand']
  %s0 = inlined_call_operand.vmem [shape: f32[2,2,8,64], index: 0, kind: input, shape index: {}]
  %s1 = inlined_call_operand.vmem [shape: f32[2,128,9], index: 1, kind: input, shape index: {}]
  %s2 = inlined_call_operand.vmem [shape: f32[2,8,128], index: 2, kind: input, shape index: {}]
  %s3 = inlined_call_operand.hbm [shape: f32[2,2,8,64], index: 3, kind: output, shape index: {0}]
  %s4 = inlined_call_operand.vmem [shape: f32[2,2,1,1], index: 4, kind: output, shape index: {1}]
  %s5 = inlined_call_operand.vmem [shape: f32[2,2,128,1], index: 5, kind: output, shape index: {2}]
  %6 = xla_tuple %s3, %s4, %s5
  %s7 = sld [smem:[#allocation0]]
  $region65: #{tpu_custom_call.1} parent=0
    _
  %s9 = ssub.s32 1, %s7
  %s10 = scalar_select 0, %s9, %s7
  $region1: #{tpu_custom_call.1} parent=0
    #allocation4 [shape = 'u8[8192]{0}', space=vmem, size = 0x2000, scoped, tag = 'output window, operand 0']
    #allocation5 [shape = 's32[2]{0}', space=sflag, size = 0x8, scoped, tag = 'scoped memory for tpu_custom_call.1']
    %11 = vsyncpa [#allocation5], 0
    %s12 = scalar_lea.sflag [#allocation5], 1
    %13 = vsyncpa %s12, 0
    loop: start=0, step=1, limit=6
    $region2: #{tpu_custom_call.1} parent=1 // loop_pre_header
      _
    $region3: #{tpu_custom_call.1} parent=1 // loop_header
      %s15 = sphi 0, %s19
      %p16 = scmp.ge.s32.totalorder %s15, 6
      %s22 = sphi 0, %s41
      %s23 = sphi 0, %s37
      %s24 = sphi 0, %s33
      %s25 = sphi 0, %s22
      %s26 = sphi 0, %s23
      %s27 = sphi 0, %s24
      %s28 = sphi 0, %s25
      %s29 = sphi 0, %s26
      %s30 = sphi 0, %s27
      %s48 = sphi 0, %s50
      %s51 = sphi 0, %s48
      %s52 = sphi 0, %s51
      %s68 = sphi 0, %s52
      %s74 = sphi 0, %s76
      %s77 = sphi 0, %s74
      %s78 = sphi 0, %s77
      %s94 = sphi 0, %s78
      %s100 = sphi 0, %s102
      %s103 = sphi 0, %s100
      %s104 = sphi 0, %s103
      %s120 = sphi 0, %s104
      %s130 = sphi 0, %s132
      %s133 = sphi 0, %s130
      %s134 = sphi 0, %s133
      %s150 = sphi 0, %s134
      %s158 = sphi 0, %s160
      %s161 = sphi 0, %s158
      %s162 = sphi 0, %s161
      %s178 = sphi 0, %s162
      %s186 = sphi 0, %s188
      %s189 = sphi 0, %s186
      %s190 = sphi 0, %s189
      %s206 = sphi 0, %s190
    $region4: #{tpu_custom_call.1} parent=1 // loop_header_branch
      %18 = sbr.rel (%p16) target = $region8
    $region5: #{tpu_custom_call.1} parent=1 // loop_body
      %s20 = ssub.s32 %s15, 1
      %s21 = ssub.s32 %s15, 2
      %s31 = sadd.s32 1, %s24
      %p32 = scmp.ge.s32.totalorder %s31, 1
      %s33 = scalar_select %p32, 0, %s31
      %s34 = sadd.s32 1, %s23
      %s35 = scalar_select %p32, %s34, %s23
      %p36 = scmp.ge.s32.totalorder %s35, 2
      %s37 = scalar_select %p36, 0, %s35
      %s38 = sadd.s32 1, %s22
      %s39 = scalar_select %p36, %s38, %s22
      %p40 = scmp.ge.s32.totalorder %s39, 2
      %s41 = scalar_select %p40, 0, %s39
      %s42 = ssub.s32 %s23, %s37
      %s43 = ssub.s32 %s22, %s41
      %s44 = sor.u32 %s42, %s43
      %s45 = ssub.s32 %s24, %s33
      %s46 = sor.u32 %s44, %s45
      %p47 = scmp.eq.s32.totalorder %s46, 0
      %s49 = sadd.s32 %s48, 1
      %s50 = scalar_select %p47, %s48, %s49
      %p53 = pneg %p47
      %p54 = scmp.eq.s32.totalorder %s15, 3
      %p55 = por %p53, %p54
      %p56 = scmp.ne.s32.totalorder %s48, %s51
      %p57 = scmp.eq.s32.totalorder %s15, 0
      %p58 = por %p56, %p57
      %p59 = scmp.ne.s32.totalorder %s48, %s51
      %p60 = scmp.eq.s32.totalorder %s20, 3
      %p61 = por %p59, %p60
      %p62 = scmp.ne.s32.totalorder %s51, %s52
      %p63 = scmp.eq.s32.totalorder %s20, 0
      %p64 = por %p62, %p63
      %p65 = scmp.ne.s32.totalorder %s51, %s52
      %p66 = scmp.eq.s32.totalorder %s21, 3
      %p67 = por %p65, %p66
      %p69 = scmp.ne.s32.totalorder %s52, %s68
      %p70 = scmp.eq.s32.totalorder %s21, 0
      %p71 = por %p69, %p70
      %s72 = ssub.s32 %s22, %s41
      %p73 = scmp.eq.s32.totalorder %s72, 0
      %s75 = sadd.s32 %s74, 1
      %s76 = scalar_select %p73, %s74, %s75
      %p79 = pneg %p73
      %p80 = scmp.eq.s32.totalorder %s15, 3
      %p81 = por %p79, %p80
      %p82 = scmp.ne.s32.totalorder %s74, %s77
      %p83 = scmp.eq.s32.totalorder %s15, 0
      %p84 = por %p82, %p83
      %p85 = scmp.ne.s32.totalorder %s74, %s77
      %p86 = scmp.eq.s32.totalorder %s20, 3
      %p87 = por %p85, %p86
      %p88 = scmp.ne.s32.totalorder %s77, %s78
      %p89 = scmp.eq.s32.totalorder %s20, 0
      %p90 = por %p88, %p89
      %p91 = scmp.ne.s32.totalorder %s77, %s78
      %p92 = scmp.eq.s32.totalorder %s21, 3
      %p93 = por %p91, %p92
      %p95 = scmp.ne.s32.totalorder %s78, %s94
      %p96 = scmp.eq.s32.totalorder %s21, 0
      %p97 = por %p95, %p96
      %s98 = ssub.s32 %s22, %s41
      %p99 = scmp.eq.s32.totalorder %s98, 0
      %s101 = sadd.s32 %s100, 1
      %s102 = scalar_select %p99, %s100, %s101
      %p105 = pneg %p99
      %p106 = scmp.eq.s32.totalorder %s15, 3
      %p107 = por %p105, %p106
      %p108 = scmp.ne.s32.totalorder %s100, %s103
      %p109 = scmp.eq.s32.totalorder %s15, 0
      %p110 = por %p108, %p109
      %p111 = scmp.ne.s32.totalorder %s100, %s103
      %p112 = scmp.eq.s32.totalorder %s20, 3
      %p113 = por %p111, %p112
      %p114 = scmp.ne.s32.totalorder %s103, %s104
      %p115 = scmp.eq.s32.totalorder %s20, 0
      %p116 = por %p114, %p115
      %p117 = scmp.ne.s32.totalorder %s103, %s104
      %p118 = scmp.eq.s32.totalorder %s21, 3
      %p119 = por %p117, %p118
      %p121 = scmp.ne.s32.totalorder %s104, %s120
      %p122 = scmp.eq.s32.totalorder %s21, 0
      %p123 = por %p121, %p122
      %s124 = ssub.s32 %s23, %s37
      %s125 = ssub.s32 %s22, %s41
      %s126 = sor.u32 %s124, %s125
      %s127 = ssub.s32 %s24, %s33
      %s128 = sor.u32 %s126, %s127
      %p129 = scmp.eq.s32.totalorder %s128, 0
      %s131 = sadd.s32 %s130, 1
      %s132 = scalar_select %p129, %s130, %s131
      %p135 = pneg %p129
      %p136 = scmp.eq.s32.totalorder %s15, 3
      %p137 = por %p135, %p136
      %p138 = scmp.ne.s32.totalorder %s130, %s133
      %p139 = scmp.eq.s32.totalorder %s15, 0
      %p140 = por %p138, %p139
      %p141 = scmp.ne.s32.totalorder %s130, %s133
      %p142 = scmp.eq.s32.totalorder %s20, 3
      %p143 = por %p141, %p142
      %p144 = scmp.ne.s32.totalorder %s133, %s134
      %p145 = scmp.eq.s32.totalorder %s20, 0
      %p146 = por %p144, %p145
      %p147 = scmp.ne.s32.totalorder %s133, %s134
      %p148 = scmp.eq.s32.totalorder %s21, 3
      %p149 = por %p147, %p148
      %p151 = scmp.ne.s32.totalorder %s134, %s150
      %p152 = scmp.eq.s32.totalorder %s21, 0
      %p153 = por %p151, %p152
      %s154 = ssub.s32 %s22, %s41
      %s155 = ssub.s32 %s23, %s37
      %s156 = sor.u32 %s154, %s155
      %p157 = scmp.eq.s32.totalorder %s156, 0
      %s159 = sadd.s32 %s158, 1
      %s160 = scalar_select %p157, %s158, %s159
      %p163 = pneg %p157
      %p164 = scmp.eq.s32.totalorder %s15, 3
      %p165 = por %p163, %p164
      %p166 = scmp.ne.s32.totalorder %s158, %s161
      %p167 = scmp.eq.s32.totalorder %s15, 0
      %p168 = por %p166, %p167
      %p169 = scmp.ne.s32.totalorder %s158, %s161
      %p170 = scmp.eq.s32.totalorder %s20, 3
      %p171 = por %p169, %p170
      %p172 = scmp.ne.s32.totalorder %s161, %s162
      %p173 = scmp.eq.s32.totalorder %s20, 0
      %p174 = por %p172, %p173
      %p175 = scmp.ne.s32.totalorder %s161, %s162
      %p176 = scmp.eq.s32.totalorder %s21, 3
      %p177 = por %p175, %p176
      %p179 = scmp.ne.s32.totalorder %s162, %s178
      %p180 = scmp.eq.s32.totalorder %s21, 0
      %p181 = por %p179, %p180
      %s182 = ssub.s32 %s22, %s41
      %s183 = ssub.s32 %s23, %s37
      %s184 = sor.u32 %s182, %s183
      %p185 = scmp.eq.s32.totalorder %s184, 0
      %s187 = sadd.s32 %s186, 1
      %s188 = scalar_select %p185, %s186, %s187
      %p191 = pneg %p185
      %p192 = scmp.eq.s32.totalorder %s15, 3
      %p193 = por %p191, %p192
      %p194 = scmp.ne.s32.totalorder %s186, %s189
      %p195 = scmp.eq.s32.totalorder %s15, 0
      %p196 = por %p194, %p195
      %p197 = scmp.ne.s32.totalorder %s186, %s189
      %p198 = scmp.eq.s32.totalorder %s20, 3
      %p199 = por %p197, %p198
      %p200 = scmp.ne.s32.totalorder %s189, %s190
      %p201 = scmp.eq.s32.totalorder %s20, 0
      %p202 = por %p200, %p201
      %p203 = scmp.ne.s32.totalorder %s189, %s190
      %p204 = scmp.eq.s32.totalorder %s21, 3
      %p205 = por %p203, %p204
      %p207 = scmp.ne.s32.totalorder %s190, %s206
      %p208 = scmp.eq.s32.totalorder %s21, 0
      %p209 = por %p207, %p208
      %p210 = scmp.le.s32.totalorder 1, %s15
      %p211 = scmp.lt.s32.totalorder %s15, 5
      %p212 = pnand %p210, %p211
      %p213 = pneg %p212
      // Predicated region
      $region9: #{tpu_custom_call.1} parent=5 // pred_check
        _
      $region10: #{tpu_custom_call.1} parent=5 // pred_check_branch
        %215 = sbr.rel (%p212) target = $region12
      $region11: #{tpu_custom_call.1} parent=5 // pred_region
        %s216 = ssub.s32 %s15, 1
      $region12: #{tpu_custom_call.1} parent=5 // pred_fallthru
        _
      %p217 = scmp.lt.s32.totalorder %s15, 4
      // Predicated region
      $region13: #{tpu_custom_call.1} parent=5 // pred_check
        %p218 = pneg %p217
      $region14: #{tpu_custom_call.1} parent=5 // pred_check_branch
        %220 = sbr.rel (%p218) target = $region16
      $region15: #{tpu_custom_call.1} parent=5 // pred_region
        // Predicated region
        $region17: #{tpu_custom_call.1} parent=15 // pred_check
          %p221 = pneg %p58
        $region18: #{tpu_custom_call.1} parent=15 // pred_check_branch
          %223 = sbr.rel (%p221) target = $region20
        $region19: #{tpu_custom_call.1} parent=15 // pred_region
          %p224 = scmp.lt.s32.totalorder %s23, 1
          %s225 = scalar_select %p224, %s23, 1
          %p226 = scmp.lt.s32.totalorder %s22, 1
          %s227 = scalar_select %p226, %s22, 1
          %p228 = scmp.lt.s32.totalorder %s24, 0
          %s229 = scalar_select %p228, %s24, 0
          %s230 = sadd.s32 %s229, %s227
          %s231 = smul.addr %s225, 2
          %s232 = sadd.s32 %s230, %s231
          %s233 = smul.addr %s232, 8
          %s234 = scalar_lea.vmem %s0, %s233
        $region20: #{tpu_custom_call.1} parent=15 // pred_fallthru
          _
        // Predicated region
        $region21: #{tpu_custom_call.1} parent=15 // pred_check
          %p235 = pneg %p84
        $region22: #{tpu_custom_call.1} parent=15 // pred_check_branch
          %237 = sbr.rel (%p235) target = $region24
        $region23: #{tpu_custom_call.1} parent=15 // pred_region
          %p238 = scmp.lt.s32.totalorder %s22, 1
          %s239 = scalar_select %p238, %s22, 1
          %s240 = smul.addr %s239, 16
          %s241 = smul.addr %s240, 8
          %s242 = scalar_lea.vmem %s1, %s241
        $region24: #{tpu_custom_call.1} parent=15 // pred_fallthru
          _
        // Predicated region
        $region25: #{tpu_custom_call.1} parent=15 // pred_check
          %p243 = pneg %p110
        $region26: #{tpu_custom_call.1} parent=15 // pred_check_branch
          %245 = sbr.rel (%p243) target = $region28
        $region27: #{tpu_custom_call.1} parent=15 // pred_region
          %p246 = scmp.lt.s32.totalorder %s22, 1
          %s247 = scalar_select %p246, %s22, 1
          %s248 = smul.addr %s247, 8
          %s249 = scalar_lea.vmem %s2, %s248
        $region28: #{tpu_custom_call.1} parent=15 // pred_fallthru
          _
      $region16: #{tpu_custom_call.1} parent=5 // pred_fallthru
        _
      %p250 = scmp.le.s32.totalorder 1, %s15
      %p251 = scmp.lt.s32.totalorder %s15, 5
      %p252 = pnand %p250, %p251
      %p253 = pneg %p252
      // Predicated region
      $region29: #{tpu_custom_call.1} parent=5 // pred_check
        _
      $region30: #{tpu_custom_call.1} parent=5 // pred_check_branch
        %255 = sbr.rel (%p252) target = $region32
      $region31: #{tpu_custom_call.1} parent=5 // pred_region
        %s256 = ssub.s32 %s15, 1
        %p257 = scmp.lt.s32.totalorder %s26, 1
        %s258 = scalar_select %p257, %s26, 1
        %p259 = scmp.lt.s32.totalorder %s25, 1
        %s260 = scalar_select %p259, %s25, 1
        %p261 = scmp.lt.s32.totalorder %s27, 0
        %s262 = scalar_select %p261, %s27, 0
        %s263 = sadd.s32 %s262, %s260
        %s264 = smul.addr %s258, 2
        %s265 = sadd.s32 %s263, %s264
        %s266 = smul.addr %s265, 8
        %s267 = scalar_lea.vmem %s0, %s266
        %p268 = pneg %p64
        %p269 = pneg %p61
        %p270 = scmp.lt.s32.totalorder %s25, 1
        %s271 = scalar_select %p270, %s25, 1
        %s272 = smul.addr %s271, 16
        %s273 = smul.addr %s272, 8
        %s274 = scalar_lea.vmem %s1, %s273
        %p275 = pneg %p90
        %p276 = pneg %p87
        %p277 = scmp.lt.s32.totalorder %s25, 1
        %s278 = scalar_select %p277, %s25, 1
        %s279 = smul.addr %s278, 8
        %s280 = scalar_lea.vmem %s2, %s279
        %p281 = pneg %p116
        %p282 = pneg %p113
        %p283 = pneg %p146
        %p284 = pneg %p143
        %s285 = sand.u32 %s133, 1
        %s286 = scalar_lea.sflag [#allocation5], %s285
        %s287 = sand.u32 %s133, 1
        %s288 = smul.addr %s287, 8
        %s289 = scalar_lea.vmem [#allocation4], %s288
        %p290 = pneg %p174
        %p291 = pneg %p171
        %p292 = scmp.lt.s32.totalorder %s25, 1
        %s293 = scalar_select %p292, %s25, 1
        %p294 = scmp.lt.s32.totalorder %s26, 1
        %s295 = scalar_select %p294, %s26, 1
        %s296 = smul.addr %s293, 2
        %s297 = sadd.s32 %s295, %s296
        %s298 = scalar_lea.vmem %s4, %s297
        %p299 = pneg %p202
        %p300 = pneg %p199
        %p301 = scmp.lt.s32.totalorder %s25, 1
        %s302 = scalar_select %p301, %s25, 1
        %p303 = scmp.lt.s32.totalorder %s26, 1
        %s304 = scalar_select %p303, %s26, 1
        %s305 = smul.addr %s304, 16
        %s306 = smul.addr %s302, 32
        %s307 = sadd.s32 %s305, %s306
        %s308 = smul.addr %s307, 8
        %s309 = scalar_lea.vmem %s5, %s308
        %p310 = scmp.lt.s32.totalorder %s26, 1
        %s311 = scalar_select %p310, %s26, 1
        %p312 = scmp.lt.s32.totalorder %s25, 1
        %s313 = scalar_select %p312, %s25, 1
        %p314 = scmp.lt.s32.totalorder %s27, 0
        %s315 = scalar_select %p314, %s27, 0
        %s316 = sadd.s32 %s315, %s313
        %s317 = smul.addr %s311, 2
        %s318 = sadd.s32 %s316, %s317
        %s319 = smul.addr %s318, 8
        %s320 = scalar_lea.vmem %s0, %s319
        %p321 = scmp.lt.s32.totalorder %s25, 1
        %s322 = scalar_select %p321, %s25, 1
        %s323 = smul.addr %s322, 16
        %s324 = smul.addr %s323, 8
        %s325 = scalar_lea.vmem %s1, %s324
        %p326 = scmp.lt.s32.totalorder %s25, 1
        %s327 = scalar_select %p326, %s25, 1
        %s328 = smul.addr %s327, 8
        %s329 = scalar_lea.vmem %s2, %s328
        %p330 = scmp.lt.s32.totalorder %s25, 1
        %s331 = scalar_select %p330, %s25, 1
        %p332 = scmp.lt.s32.totalorder %s26, 1
        %s333 = scalar_select %p332, %s26, 1
        %s334 = smul.addr %s331, 2
        %s335 = sadd.s32 %s333, %s334
        %s336 = scalar_lea.vmem %s4, %s335
        %p337 = scmp.lt.s32.totalorder %s25, 1
        %s338 = scalar_select %p337, %s25, 1
        %p339 = scmp.lt.s32.totalorder %s26, 1
        %s340 = scalar_select %p339, %s26, 1
        %s341 = smul.addr %s340, 16
        %s342 = smul.addr %s338, 32
        %s343 = sadd.s32 %s341, %s342
        %s344 = smul.addr %s343, 8
        %s345 = scalar_lea.vmem %s5, %s344
        %v346 = vld [vmem:[%s325] sm:$0xff]
        %v347 = vld [vmem:[%s325 + $0x8] sm:$0xff]
        %v348 = vld [vmem:[%s325 + $0x10] sm:$0xff]
        %v349 = vld [vmem:[%s325 + $0x18] sm:$0xff]
        %v350 = vld [vmem:[%s325 + $0x20] sm:$0xff]
        %v351 = vld [vmem:[%s325 + $0x28] sm:$0xff]
        %v352 = vld [vmem:[%s325 + $0x30] sm:$0xff]
        %v353 = vld [vmem:[%s325 + $0x38] sm:$0xff]
        %v354 = vld [vmem:[%s325 + $0x40] sm:$0xff]
        %v355 = vld [vmem:[%s325 + $0x48] sm:$0xff]
        %v356 = vld [vmem:[%s325 + $0x50] sm:$0xff]
        %v357 = vld [vmem:[%s325 + $0x58] sm:$0xff]
        %v358 = vld [vmem:[%s325 + $0x60] sm:$0xff]
        %v359 = vld [vmem:[%s325 + $0x68] sm:$0xff]
        %v360 = vld [vmem:[%s325 + $0x70] sm:$0xff]
        %v361 = vld [vmem:[%s325 + $0x78] sm:$0xff]
        %v362 = vld [vmem:[%s329] sm:$0xff]
        %p363 = scmp.eq.s32.totalorder %s27, 0
        // Predicated region
        $region33: #{tpu_custom_call.1} parent=31 // pred_check
          %p364 = pneg %p363
        $region34: #{tpu_custom_call.1} parent=31 // pred_check_branch
          %366 = sbr.rel (%p364) target = $region36
        $region35: #{tpu_custom_call.1} parent=31 // pred_region
          %vm367 = vcmask 0
          %368 = vst.msk [vmem:[%s336] sm:$0x1] %vm367, 0.0
          %vm369 = vcmask 7168
          %370 = vst.msk [vmem:[%s345] sm:$0xff] %vm369, 0.0
          %371 = vst.msk [vmem:[%s345 + $0x8] sm:$0xff] %vm369, 0.0
          %372 = vst.msk [vmem:[%s345 + $0x10] sm:$0xff] %vm369, 0.0
          %373 = vst.msk [vmem:[%s345 + $0x18] sm:$0xff] %vm369, 0.0
          %374 = vst.msk [vmem:[%s345 + $0x20] sm:$0xff] %vm369, 0.0
          %375 = vst.msk [vmem:[%s345 + $0x28] sm:$0xff] %vm369, 0.0
          %376 = vst.msk [vmem:[%s345 + $0x30] sm:$0xff] %vm369, 0.0
          %377 = vst.msk [vmem:[%s345 + $0x38] sm:$0xff] %vm369, 0.0
          %378 = vst.msk [vmem:[%s345 + $0x40] sm:$0xff] %vm369, 0.0
          %379 = vst.msk [vmem:[%s345 + $0x48] sm:$0xff] %vm369, 0.0
          %380 = vst.msk [vmem:[%s345 + $0x50] sm:$0xff] %vm369, 0.0
          %381 = vst.msk [vmem:[%s345 + $0x58] sm:$0xff] %vm369, 0.0
          %382 = vst.msk [vmem:[%s345 + $0x60] sm:$0xff] %vm369, 0.0
          %383 = vst.msk [vmem:[%s345 + $0x68] sm:$0xff] %vm369, 0.0
          %384 = vst.msk [vmem:[%s345 + $0x70] sm:$0xff] %vm369, 0.0
          %385 = vst.msk [vmem:[%s345 + $0x78] sm:$0xff] %vm369, 0.0
          %vm386 = vcmask 516096
          %387 = vst.msk [vmem:[#allocation2 + $0x8] sm:$0x1] %vm386, 1.0
          %v388 = vlaneseq
          %v389 = vshrl.u32 %v388, 7
          %v390 = vadd.s32 %v389, 8
          %v391 = vadd.s32 %v389, 16
          %v392 = vadd.s32 %v389, 24
          %v393 = vadd.s32 %v389, 32
          %v394 = vadd.s32 %v389, 40
          %v395 = vadd.s32 %v389, 48
          %v396 = vadd.s32 %v389, 56
          %v397 = vadd.s32 %v389, 64
          %v398 = vadd.s32 %v389, 72
          %v399 = vadd.s32 %v389, 80
          %v400 = vadd.s32 %v389, 88
          %v401 = vadd.s32 %v389, 96
          %v402 = vadd.s32 %v389, 104
          %v403 = vadd.s32 %v389, 112
          %v404 = vadd.s32 %v389, 120
          %vm405 = vcmask 523264
          %406 = vst.msk [vmem:[#allocation3] sm:$0xff] %vm405, %v389
          %407 = vst.msk [vmem:[#allocation3 + $0x8] sm:$0xff] %vm405, %v390
          %408 = vst.msk [vmem:[#allocation3 + $0x10] sm:$0xff] %vm405, %v391
          %409 = vst.msk [vmem:[#allocation3 + $0x18] sm:$0xff] %vm405, %v392
          %410 = vst.msk [vmem:[#allocation3 + $0x20] sm:$0xff] %vm405, %v393
          %411 = vst.msk [vmem:[#allocation3 + $0x28] sm:$0xff] %vm405, %v394
          %412 = vst.msk [vmem:[#allocation3 + $0x30] sm:$0xff] %vm405, %v395
          %413 = vst.msk [vmem:[#allocation3 + $0x38] sm:$0xff] %vm405, %v396
          %414 = vst.msk [vmem:[#allocation3 + $0x40] sm:$0xff] %vm405, %v397
          %415 = vst.msk [vmem:[#allocation3 + $0x48] sm:$0xff] %vm405, %v398
          %416 = vst.msk [vmem:[#allocation3 + $0x50] sm:$0xff] %vm405, %v399
          %417 = vst.msk [vmem:[#allocation3 + $0x58] sm:$0xff] %vm405, %v400
          %418 = vst.msk [vmem:[#allocation3 + $0x60] sm:$0xff] %vm405, %v401
          %419 = vst.msk [vmem:[#allocation3 + $0x68] sm:$0xff] %vm405, %v402
          %420 = vst.msk [vmem:[#allocation3 + $0x70] sm:$0xff] %vm405, %v403
          %421 = vst.msk [vmem:[#allocation3 + $0x78] sm:$0xff] %vm405, %v404
        $region36: #{tpu_custom_call.1} parent=31 // pred_fallthru
          _
        %v422 = vld [vmem:[%s320] sm:$0xff]
        %vm423 = vcmask 523264
        %424 = vst.msk [vmem:[#allocation2] sm:$0xff] %vm423, %v422
        %v425 = vld [vmem:[#allocation2] sm:$0xff]
        %v426 = vld [vmem:[#allocation2 + $0x8] sm:$0x1]
        %vm427 = vcmask 72704
        %v429 = vsel %vm427, %v346, 0
        %v432 = vsel %vm427, %v347, 0
        %v435 = vsel %vm427, %v348, 0
        %v438 = vsel %vm427, %v349, 0
        %v441 = vsel %vm427, %v350, 0
        %v444 = vsel %vm427, %v351, 0
        %v447 = vsel %vm427, %v352, 0
        %v450 = vsel %vm427, %v353, 0
        %v453 = vsel %vm427, %v354, 0
        %v456 = vsel %vm427, %v355, 0
        %v459 = vsel %vm427, %v356, 0
        %v462 = vsel %vm427, %v357, 0
        %v465 = vsel %vm427, %v358, 0
        %v468 = vsel %vm427, %v359, 0
        %v471 = vsel %vm427, %v360, 0
        %v474 = vsel %vm427, %v361, 0
        %vm476 = vcmask 1040384
        %v478 = vsel %vm476, %v426, 0
        %480 = vmatprep.subr.mxu0 0.0
        %481 = vmatpush1.msra.mxu0 %v425
        %482 = vmatprep.subr.mxu0 0.0
        %483 = vmatpush1.msra.mxu0 %v478
        %484 = vmatprep.subr.mxu0 0.0
        %485 = vmatpush1.msra.mxu0 0.0
        %486 = vmatprep.subr.mxu0 0.0
        %487 = vmatpush1.msra.mxu0 0.0
        %488 = vmatprep.subr.mxu0 0.0
        %489 = vmatpush1.msra.mxu0 0.0
        %490 = vmatprep.subr.mxu0 0.0
        %491 = vmatpush1.msra.mxu0 0.0
        %492 = vmatprep.subr.mxu0 0.0
        %493 = vmatpush1.msra.mxu0 0.0
        %494 = vmatprep.subr.mxu0 0.0
        %495 = vmatpush1.msra.mxu0 0.0
        %496 = vmatprep.subr.mxu0 0.0
        %497 = vmatpush1.msra.mxu0 0.0
        %498 = vmatprep.subr.mxu0 0.0
        %499 = vmatpush1.msra.mxu0 0.0
        %500 = vmatprep.subr.mxu0 0.0
        %501 = vmatpush1.msra.mxu0 0.0
        %502 = vmatprep.subr.mxu0 0.0
        %503 = vmatpush1.msra.mxu0 0.0
        %504 = vmatprep.subr.mxu0 0.0
        %505 = vmatpush1.msra.mxu0 0.0
        %506 = vmatprep.subr.mxu0 0.0
        %507 = vmatpush1.msra.mxu0 0.0
        %508 = vmatprep.subr.mxu0 0.0
        %509 = vmatpush1.msra.mxu0 0.0
        %510 = vmatprep.subr.mxu0 0.0
        %511 = vmatpush1.msra.mxu0 0.0
        %512 = vmatprep.subr.mxu0 0.0
        %513 = vmatpush1.msra.mxu0 0.0
        %514 = vmatprep.subr.mxu0 0.0
        %515 = vmatpush1.msra.mxu0 0.0
        %516 = vmatprep.subr.mxu0 0.0
        %517 = vmatpush1.msra.mxu0 0.0
        %518 = vmatprep.subr.mxu0 0.0
        %519 = vmatpush1.msra.mxu0 0.0
        %520 = vmatprep.subr.mxu0 0.0
        %521 = vmatpush1.msra.mxu0 0.0
        %522 = vmatprep.subr.mxu0 0.0
        %523 = vmatpush1.msra.mxu0 0.0
        %524 = vmatprep.subr.mxu0 0.0
        %525 = vmatpush1.msra.mxu0 0.0
        %526 = vmatprep.subr.mxu0 0.0
        %527 = vmatpush1.msra.mxu0 0.0
        %528 = vmatprep.subr.mxu0 0.0
        %529 = vmatpush1.msra.mxu0 0.0
        %530 = vmatprep.subr.mxu0 0.0
        %531 = vmatpush1.msra.mxu0 0.0
        %532 = vmatprep.subr.mxu0 0.0
        %533 = vmatpush1.msra.mxu0 0.0
        %534 = vmatprep.subr.mxu0 0.0
        %535 = vmatpush1.msra.mxu0 0.0
        %536 = vmatprep.subr.mxu0 0.0
        %537 = vmatpush1.msra.mxu0 0.0
        %538 = vmatprep.subr.mxu0 0.0
        %539 = vmatpush1.msra.mxu0 0.0
        %540 = vmatprep.subr.mxu0 0.0
        %541 = vmatpush1.msra.mxu0 0.0
        %542 = vmatprep.subr.mxu0 0.0
        %543 = vmatpush1.msra.mxu0 0.0
        %544 = vmatprep.mubr.f32.mxu0 0.0
        %545 = vmatmul.mubr.f32.gmra.mrb[0].mxu0 %v429
        %v546 = vpop.f32.mrb[0].mxu0
        %v547 = vadd.f32 0.0, %v546
        %v548 = vpop.f32.mrb[0].mxu0
        %549 = vmatprep.mubr.f32.mxu0 0.0
        %550 = vmatmul.mubr.f32.gmra.mrb[0].mxu0 %v432
        %v551 = vpop.f32.mrb[0].mxu0
        %v552 = vadd.f32 0.0, %v551
        %v553 = vpop.f32.mrb[0].mxu0
        %554 = vmatprep.mubr.f32.mxu0 0.0
        %555 = vmatmul.mubr.f32.gmra.mrb[0].mxu0 %v435
        %v556 = vpop.f32.mrb[0].mxu0
        %v557 = vadd.f32 0.0, %v556
        %v558 = vpop.f32.mrb[0].mxu0
        %559 = vmatprep.mubr.f32.mxu0 0.0
        %560 = vmatmul.mubr.f32.gmra.mrb[0].mxu0 %v438
        %v561 = vpop.f32.mrb[0].mxu0
        %v562 = vadd.f32 0.0, %v561
        %v563 = vpop.f32.mrb[0].mxu0
        %564 = vmatprep.mubr.f32.mxu0 0.0
        %565 = vmatmul.mubr.f32.gmra.mrb[0].mxu0 %v441
        %v566 = vpop.f32.mrb[0].mxu0
        %v567 = vadd.f32 0.0, %v566
        %v568 = vpop.f32.mrb[0].mxu0
        %569 = vmatprep.mubr.f32.mxu0 0.0
        %570 = vmatmul.mubr.f32.gmra.mrb[0].mxu0 %v444
        %v571 = vpop.f32.mrb[0].mxu0
        %v572 = vadd.f32 0.0, %v571
        %v573 = vpop.f32.mrb[0].mxu0
        %574 = vmatprep.mubr.f32.mxu0 0.0
        %575 = vmatmul.mubr.f32.gmra.mrb[0].mxu0 %v447
        %v576 = vpop.f32.mrb[0].mxu0
        %v577 = vadd.f32 0.0, %v576
        %v578 = vpop.f32.mrb[0].mxu0
        %579 = vmatprep.mubr.f32.mxu0 0.0
        %580 = vmatmul.mubr.f32.gmra.mrb[0].mxu0 %v450
        %v581 = vpop.f32.mrb[0].mxu0
        %v582 = vadd.f32 0.0, %v581
        %v583 = vpop.f32.mrb[0].mxu0
        %584 = vmatprep.mubr.f32.mxu0 0.0
        %585 = vmatmul.mubr.f32.gmra.mrb[0].mxu0 %v453
        %v586 = vpop.f32.mrb[0].mxu0
        %v587 = vadd.f32 0.0, %v586
        %v588 = vpop.f32.mrb[0].mxu0
        %589 = vmatprep.mubr.f32.mxu0 0.0
        %590 = vmatmul.mubr.f32.gmra.mrb[0].mxu0 %v456
        %v591 = vpop.f32.mrb[0].mxu0
        %v592 = vadd.f32 0.0, %v591
        %v593 = vpop.f32.mrb[0].mxu0
        %594 = vmatprep.mubr.f32.mxu0 0.0
        %595 = vmatmul.mubr.f32.gmra.mrb[0].mxu0 %v459
        %v596 = vpop.f32.mrb[0].mxu0
        %v597 = vadd.f32 0.0, %v596
        %v598 = vpop.f32.mrb[0].mxu0
        %599 = vmatprep.mubr.f32.mxu0 0.0
        %600 = vmatmul.mubr.f32.gmra.mrb[0].mxu0 %v462
        %v601 = vpop.f32.mrb[0].mxu0
        %v602 = vadd.f32 0.0, %v601
        %v603 = vpop.f32.mrb[0].mxu0
        %604 = vmatprep.mubr.f32.mxu0 0.0
        %605 = vmatmul.mubr.f32.gmra.mrb[0].mxu0 %v465
        %v606 = vpop.f32.mrb[0].mxu0
        %v607 = vadd.f32 0.0, %v606
        %v608 = vpop.f32.mrb[0].mxu0
        %609 = vmatprep.mubr.f32.mxu0 0.0
        %610 = vmatmul.mubr.f32.gmra.mrb[0].mxu0 %v468
        %v611 = vpop.f32.mrb[0].mxu0
        %v612 = vadd.f32 0.0, %v611
        %v613 = vpop.f32.mrb[0].mxu0
        %614 = vmatprep.mubr.f32.mxu0 0.0
        %615 = vmatmul.mubr.f32.gmra.mrb[0].mxu0 %v471
        %v616 = vpop.f32.mrb[0].mxu0
        %v617 = vadd.f32 0.0, %v616
        %v618 = vpop.f32.mrb[0].mxu0
        %619 = vmatprep.mubr.f32.mxu0 0.0
        %620 = vmatmul.mubr.f32.gmra.mrb[0].mxu0 %v474
        %v621 = vpop.f32.mrb[0].mxu0
        %v622 = vadd.f32 0.0, %v621
        %v623 = vpop.f32.mrb[0].mxu0
        %624 = vdwg.mxu0
        %v625 = vsel %vm423, %v547, -inf
        %v626 = vsel %vm423, %v552, -inf
        %v627 = vsel %vm423, %v557, -inf
        %v628 = vsel %vm423, %v562, -inf
        %v629 = vsel %vm423, %v567, -inf
        %v630 = vmax.f32 %v625, %v629
        %v631 = vsel %vm423, %v572, -inf
        %v632 = vmax.f32 %v626, %v631
        %v633 = vsel %vm423, %v577, -inf
        %v634 = vmax.f32 %v627, %v633
        %v635 = vsel %vm423, %v582, -inf
        %v636 = vmax.f32 %v628, %v635
        %v637 = vsel %vm423, %v587, -inf
        %v638 = vmax.f32 %v630, %v637
        %v639 = vsel %vm423, %v592, -inf
        %v640 = vmax.f32 %v632, %v639
        %v641 = vsel %vm423, %v597, -inf
        %v642 = vmax.f32 %v634, %v641
        %v643 = vsel %vm423, %v602, -inf
        %v644 = vmax.f32 %v636, %v643
        %v645 = vsel %vm423, %v607, -inf
        %v646 = vmax.f32 %v638, %v645
        %v647 = vsel %vm423, %v612, -inf
        %v648 = vmax.f32 %v640, %v647
        %v649 = vsel %vm423, %v617, -inf
        %v650 = vmax.f32 %v642, %v649
        %v651 = vsel %vm423, %v622, -inf
        %v652 = vmax.f32 %v644, %v651
        %v653 = vmax.f32 %v646, %v648
        %v654 = vmax.f32 %v650, %v652
        %v655 = vmax.f32 %v653, %v654
        %v656 = vrot.slane %v655, 4
        %v657 = vmax.f32 %v655, %v656
        %v658 = vrot.slane %v657, 2
        %v659 = vmax.f32 %v657, %v658
        %v660 = vrot.slane %v659, 1
        %v661 = vmax.f32 %v659, %v660
        %v662 = vsub.f32 %v547, %v661
        %v663 = vsub.f32 %v552, %v661
        %v664 = vsub.f32 %v557, %v661
        %v665 = vsub.f32 %v562, %v661
        %v666 = vsub.f32 %v567, %v661
        %v667 = vsub.f32 %v572, %v661
        %v668 = vsub.f32 %v577, %v661
        %v669 = vsub.f32 %v582, %v661
        %v670 = vsub.f32 %v587, %v661
        %v671 = vsub.f32 %v592, %v661
        %v672 = vsub.f32 %v597, %v661
        %v673 = vsub.f32 %v602, %v661
        %v674 = vsub.f32 %v607, %v661
        %v675 = vsub.f32 %v612, %v661
        %v676 = vsub.f32 %v617, %v661
        %v677 = vsub.f32 %v622, %v661
        %v678 = vmul.f32 %v662, 1.442695
        %v679 = vpow.pop %v678
        %v680 = vmul.f32 %v663, 1.442695
        %v681 = vpow.pop %v680
        %v682 = vmul.f32 %v664, 1.442695
        %v683 = vpow.pop %v682
        %v684 = vmul.f32 %v665, 1.442695
        %v685 = vpow.pop %v684
        %v686 = vmul.f32 %v666, 1.442695
        %v687 = vpow.pop %v686
        %v688 = vmul.f32 %v667, 1.442695
        %v689 = vpow.pop %v688
        %v690 = vmul.f32 %v668, 1.442695
        %v691 = vpow.pop %v690
        %v692 = vmul.f32 %v669, 1.442695
        %v693 = vpow.pop %v692
        %v694 = vmul.f32 %v670, 1.442695
        %v695 = vpow.pop %v694
        %v696 = vmul.f32 %v671, 1.442695
        %v697 = vpow.pop %v696
        %v698 = vmul.f32 %v672, 1.442695
        %v699 = vpow.pop %v698
        %v700 = vmul.f32 %v673, 1.442695
        %v701 = vpow.pop %v700
        %v702 = vmul.f32 %v674, 1.442695
        %v703 = vpow.pop %v702
        %v704 = vmul.f32 %v675, 1.442695
        %v705 = vpow.pop %v704
        %v706 = vmul.f32 %v676, 1.442695
        %v707 = vpow.pop %v706
        %v708 = vmul.f32 %v677, 1.442695
        %v709 = vpow.pop %v708
        %v710 = vsel %vm423, %v679, 0.0
        %v711 = vsel %vm423, %v681, 0.0
        %v712 = vadd.f32 %v710, %v711
        %v713 = vsel %vm423, %v683, 0.0
        %v714 = vadd.f32 %v712, %v713
        %v715 = vsel %vm423, %v685, 0.0
        %v716 = vadd.f32 %v714, %v715
        %v717 = vsel %vm423, %v687, 0.0
        %v718 = vadd.f32 %v716, %v717
        %v719 = vsel %vm423, %v689, 0.0
        %v720 = vadd.f32 %v718, %v719
        %v721 = vsel %vm423, %v691, 0.0
        %v722 = vadd.f32 %v720, %v721
        %v723 = vsel %vm423, %v693, 0.0
        %v724 = vadd.f32 %v722, %v723
        %v725 = vsel %vm423, %v695, 0.0
        %v726 = vadd.f32 %v724, %v725
        %v727 = vsel %vm423, %v697, 0.0
        %v728 = vadd.f32 %v726, %v727
        %v729 = vsel %vm423, %v699, 0.0
        %v730 = vadd.f32 %v728, %v729
        %v731 = vsel %vm423, %v701, 0.0
        %v732 = vadd.f32 %v730, %v731
        %v733 = vsel %vm423, %v703, 0.0
        %v734 = vadd.f32 %v732, %v733
        %v735 = vsel %vm423, %v705, 0.0
        %v736 = vadd.f32 %v734, %v735
        %v737 = vsel %vm423, %v707, 0.0
        %v738 = vadd.f32 %v736, %v737
        %v739 = vsel %vm423, %v709, 0.0
        %v740 = vadd.f32 %v738, %v739
        %v741 = vrot.slane %v740, 4
        %v742 = vadd.f32 %v740, %v741
        %v743 = vrot.slane %v742, 2
        %v744 = vadd.f32 %v742, %v743
        %v745 = vrot.slane %v744, 1
        %v746 = vadd.f32 %v744, %v745
        %v747 = vmul.f32 %v679, %v662
        %v748 = vmul.f32 %v681, %v663
        %v749 = vmul.f32 %v683, %v664
        %v750 = vmul.f32 %v685, %v665
        %v751 = vmul.f32 %v687, %v666
        %v752 = vmul.f32 %v689, %v667
        %v753 = vmul.f32 %v691, %v668
        %v754 = vmul.f32 %v693, %v669
        %v755 = vmul.f32 %v695, %v670
        %v756 = vmul.f32 %v697, %v671
        %v757 = vmul.f32 %v699, %v672
        %v758 = vmul.f32 %v701, %v673
        %v759 = vmul.f32 %v703, %v674
        %v760 = vmul.f32 %v705, %v675
        %v761 = vmul.f32 %v707, %v676
        %v762 = vmul.f32 %v709, %v677
        %v763 = vsel %vm423, %v747, 0.0
        %v764 = vsel %vm423, %v748, 0.0
        %v765 = vadd.f32 %v763, %v764
        %v766 = vsel %vm423, %v749, 0.0
        %v767 = vadd.f32 %v765, %v766
        %v768 = vsel %vm423, %v750, 0.0
        %v769 = vadd.f32 %v767, %v768
        %v770 = vsel %vm423, %v751, 0.0
        %v771 = vadd.f32 %v769, %v770
        %v772 = vsel %vm423, %v752, 0.0
        %v773 = vadd.f32 %v771, %v772
        %v774 = vsel %vm423, %v753, 0.0
        %v775 = vadd.f32 %v773, %v774
        %v776 = vsel %vm423, %v754, 0.0
        %v777 = vadd.f32 %v775, %v776
        %v778 = vsel %vm423, %v755, 0.0
        %v779 = vadd.f32 %v777, %v778
        %v780 = vsel %vm423, %v756, 0.0
        %v781 = vadd.f32 %v779, %v780
        %v782 = vsel %vm423, %v757, 0.0
        %v783 = vadd.f32 %v781, %v782
        %v784 = vsel %vm423, %v758, 0.0
        %v785 = vadd.f32 %v783, %v784
        %v786 = vsel %vm423, %v759, 0.0
        %v787 = vadd.f32 %v785, %v786
        %v788 = vsel %vm423, %v760, 0.0
        %v789 = vadd.f32 %v787, %v788
        %v790 = vsel %vm423, %v761, 0.0
        %v791 = vadd.f32 %v789, %v790
        %v792 = vsel %vm423, %v762, 0.0
        %v793 = vadd.f32 %v791, %v792
        %v794 = vrot.slane %v793, 4
        %v795 = vadd.f32 %v793, %v794
        %v796 = vrot.slane %v795, 2
        %v797 = vadd.f32 %v795, %v796
        %v798 = vrot.slane %v797, 1
        %v799 = vadd.f32 %v797, %v798
        %v800 = vrcp.pop %v746
        %v801 = vmul.f32 %v799, %v800
        %v802 = vlog2.pop %v746
        %v803 = vmul.f32 %v802, 0.6931472
        %v804 = vsub.f32 %v801, %v803
        %v805 = vadd.f32 %v804, 4.8520303
        %v806 = vadd.f32 %v805, 0.0
        %v807 = vld [vmem:[#allocation3] sm:$0xff]
        %v808 = vld [vmem:[#allocation3 + $0x8] sm:$0xff]
        %v809 = vld [vmem:[#allocation3 + $0x10] sm:$0xff]
        %v810 = vld [vmem:[#allocation3 + $0x18] sm:$0xff]
        %v811 = vld [vmem:[#allocation3 + $0x20] sm:$0xff]
        %v812 = vld [vmem:[#allocation3 + $0x28] sm:$0xff]
        %v813 = vld [vmem:[#allocation3 + $0x30] sm:$0xff]
        %v814 = vld [vmem:[#allocation3 + $0x38] sm:$0xff]
        %v815 = vld [vmem:[#allocation3 + $0x40] sm:$0xff]
        %v816 = vld [vmem:[#allocation3 + $0x48] sm:$0xff]
        %v817 = vld [vmem:[#allocation3 + $0x50] sm:$0xff]
        %v818 = vld [vmem:[#allocation3 + $0x58] sm:$0xff]
        %v819 = vld [vmem:[#allocation3 + $0x60] sm:$0xff]
        %v820 = vld [vmem:[#allocation3 + $0x68] sm:$0xff]
        %v821 = vld [vmem:[#allocation3 + $0x70] sm:$0xff]
        %v822 = vld [vmem:[#allocation3 + $0x78] sm:$0xff]
        %vm823 = vcmp.eq.f32.partialorder %v662, 0.0
        %vm824 = vcmp.eq.f32.partialorder %v663, 0.0
        %vm825 = vcmp.eq.f32.partialorder %v664, 0.0
        %vm826 = vcmp.eq.f32.partialorder %v665, 0.0
        %vm827 = vcmp.eq.f32.partialorder %v666, 0.0
        %vm828 = vcmp.eq.f32.partialorder %v667, 0.0
        %vm829 = vcmp.eq.f32.partialorder %v668, 0.0
        %vm830 = vcmp.eq.f32.partialorder %v669, 0.0
        %vm831 = vcmp.eq.f32.partialorder %v670, 0.0
        %vm832 = vcmp.eq.f32.partialorder %v671, 0.0
        %vm833 = vcmp.eq.f32.partialorder %v672, 0.0
        %vm834 = vcmp.eq.f32.partialorder %v673, 0.0
        %vm835 = vcmp.eq.f32.partialorder %v674, 0.0
        %vm836 = vcmp.eq.f32.partialorder %v675, 0.0
        %vm837 = vcmp.eq.f32.partialorder %v676, 0.0
        %vm838 = vcmp.eq.f32.partialorder %v677, 0.0
        %v839 = vsel %vm823, %v807, 128
        %v840 = vsel %vm824, %v808, 128
        %v841 = vsel %vm825, %v809, 128
        %v842 = vsel %vm826, %v810, 128
        %v843 = vsel %vm827, %v811, 128
        %v844 = vsel %vm828, %v812, 128
        %v845 = vsel %vm829, %v813, 128
        %v846 = vsel %vm830, %v814, 128
        %v847 = vsel %vm831, %v815, 128
        %v848 = vsel %vm832, %v816, 128
        %v849 = vsel %vm833, %v817, 128
        %v850 = vsel %vm834, %v818, 128
        %v851 = vsel %vm835, %v819, 128
        %v852 = vsel %vm836, %v820, 128
        %v853 = vsel %vm837, %v821, 128
        %v854 = vsel %vm838, %v822, 128
        %v855 = vsel %vm423, %v839, 2147483647
        %v856 = vsel %vm423, %v840, 2147483647
        %v857 = vsel %vm423, %v841, 2147483647
        %v858 = vsel %vm423, %v842, 2147483647
        %v859 = vsel %vm423, %v843, 2147483647
        %vm860 = vcmp.lt.s32.totalorder %v855, %v859
        %v861 = vsel %vm860, %v855, %v859
        %v862 = vsel %vm423, %v844, 2147483647
        %vm863 = vcmp.lt.s32.totalorder %v856, %v862
        %v864 = vsel %vm863, %v856, %v862
        %v865 = vsel %vm423, %v845, 2147483647
        %vm866 = vcmp.lt.s32.totalorder %v857, %v865
        %v867 = vsel %vm866, %v857, %v865
        %v868 = vsel %vm423, %v846, 2147483647
        %vm869 = vcmp.lt.s32.totalorder %v858, %v868
        %v870 = vsel %vm869, %v858, %v868
        %v871 = vsel %vm423, %v847, 2147483647
        %vm872 = vcmp.lt.s32.totalorder %v861, %v871
        %v873 = vsel %vm872, %v861, %v871
        %v874 = vsel %vm423, %v848, 2147483647
        %vm875 = vcmp.lt.s32.totalorder %v864, %v874
        %v876 = vsel %vm875, %v864, %v874
        %v877 = vsel %vm423, %v849, 2147483647
        %vm878 = vcmp.lt.s32.totalorder %v867, %v877
        %v879 = vsel %vm878, %v867, %v877
        %v880 = vsel %vm423, %v850, 2147483647
        %vm881 = vcmp.lt.s32.totalorder %v870, %v880
        %v882 = vsel %vm881, %v870, %v880
        %v883 = vsel %vm423, %v851, 2147483647
        %vm884 = vcmp.lt.s32.totalorder %v873, %v883
        %v885 = vsel %vm884, %v873, %v883
        %v886 = vsel %vm423, %v852, 2147483647
        %vm887 = vcmp.lt.s32.totalorder %v876, %v886
        %v888 = vsel %vm887, %v876, %v886
        %v889 = vsel %vm423, %v853, 2147483647
        %vm890 = vcmp.lt.s32.totalorder %v879, %v889
        %v891 = vsel %vm890, %v879, %v889
        %v892 = vsel %vm423, %v854, 2147483647
        %vm893 = vcmp.lt.s32.totalorder %v882, %v892
        %v894 = vsel %vm893, %v882, %v892
        %vm895 = vcmp.lt.s32.totalorder %v885, %v888
        %v896 = vsel %vm895, %v885, %v888
        %vm897 = vcmp.lt.s32.totalorder %v891, %v894
        %v898 = vsel %vm897, %v891, %v894
        %vm899 = vcmp.lt.s32.totalorder %v896, %v898
        %v900 = vsel %vm899, %v896, %v898
        %v901 = vrot.slane %v900, 4
        %vm902 = vcmp.lt.s32.totalorder %v900, %v901
        %v903 = vsel %vm902, %v900, %v901
        %v904 = vrot.slane %v903, 2
        %vm905 = vcmp.lt.s32.totalorder %v903, %v904
        %v906 = vsel %vm905, %v903, %v904
        %v907 = vrot.slane %v906, 1
        %vm908 = vcmp.lt.s32.totalorder %v906, %v907
        %v909 = vsel %vm908, %v906, %v907
        %vm910 = vcmp.eq.s32.totalorder %v807, %v909
        %vm911 = vcmp.eq.s32.totalorder %v808, %v909
        %vm912 = vcmp.eq.s32.totalorder %v809, %v909
        %vm913 = vcmp.eq.s32.totalorder %v810, %v909
        %vm914 = vcmp.eq.s32.totalorder %v811, %v909
        %vm915 = vcmp.eq.s32.totalorder %v812, %v909
        %vm916 = vcmp.eq.s32.totalorder %v813, %v909
        %vm917 = vcmp.eq.s32.totalorder %v814, %v909
        %vm918 = vcmp.eq.s32.totalorder %v815, %v909
        %vm919 = vcmp.eq.s32.totalorder %v816, %v909
        %vm920 = vcmp.eq.s32.totalorder %v817, %v909
        %vm921 = vcmp.eq.s32.totalorder %v818, %v909
        %vm922 = vcmp.eq.s32.totalorder %v819, %v909
        %vm923 = vcmp.eq.s32.totalorder %v820, %v909
        %vm924 = vcmp.eq.s32.totalorder %v821, %v909
        %vm925 = vcmp.eq.s32.totalorder %v822, %v909
        %v926 = vsel %vm910, 1, 0
        %v927 = vsel %vm911, 1, 0
        %v928 = vsel %vm912, 1, 0
        %v929 = vsel %vm913, 1, 0
        %v930 = vsel %vm914, 1, 0
        %v931 = vsel %vm915, 1, 0
        %v932 = vsel %vm916, 1, 0
        %v933 = vsel %vm917, 1, 0
        %v934 = vsel %vm918, 1, 0
        %v935 = vsel %vm919, 1, 0
        %v936 = vsel %vm920, 1, 0
        %v937 = vsel %vm921, 1, 0
        %v938 = vsel %vm922, 1, 0
        %v939 = vsel %vm923, 1, 0
        %v940 = vsel %vm924, 1, 0
        %v941 = vsel %vm925, 1, 0
        %v942 = vcvt.s32.f32 %v926
        %v943 = vcvt.s32.f32 %v927
        %v944 = vcvt.s32.f32 %v928
        %v945 = vcvt.s32.f32 %v929
        %v946 = vcvt.s32.f32 %v930
        %v947 = vcvt.s32.f32 %v931
        %v948 = vcvt.s32.f32 %v932
        %v949 = vcvt.s32.f32 %v933
        %v950 = vcvt.s32.f32 %v934
        %v951 = vcvt.s32.f32 %v935
        %v952 = vcvt.s32.f32 %v936
        %v953 = vcvt.s32.f32 %v937
        %v954 = vcvt.s32.f32 %v938
        %v955 = vcvt.s32.f32 %v939
        %v956 = vcvt.s32.f32 %v940
        %v957 = vcvt.s32.f32 %v941
        %958 = vmatprep.subr.mxu0 0.0
        %959 = vmatpush1.msra.mxu0 %v942
        %960 = vmatprep.subr.mxu0 0.0
        %961 = vmatpush1.msra.mxu0 %v943
        %962 = vmatprep.subr.mxu0 0.0
        %963 = vmatpush1.msra.mxu0 %v944
        %964 = vmatprep.subr.mxu0 0.0
        %965 = vmatpush1.msra.mxu0 %v945
        %966 = vmatprep.subr.mxu0 0.0
        %967 = vmatpush1.msra.mxu0 %v946
        %968 = vmatprep.subr.mxu0 0.0
        %969 = vmatpush1.msra.mxu0 %v947
        %970 = vmatprep.subr.mxu0 0.0
        %971 = vmatpush1.msra.mxu0 %v948
        %972 = vmatprep.subr.mxu0 0.0
        %973 = vmatpush1.msra.mxu0 %v949
        %974 = vmatprep.subr.mxu0 0.0
        %975 = vmatpush1.msra.mxu0 %v950
        %976 = vmatprep.subr.mxu0 0.0
        %977 = vmatpush1.msra.mxu0 %v951
        %978 = vmatprep.subr.mxu0 0.0
        %979 = vmatpush1.msra.mxu0 %v952
        %980 = vmatprep.subr.mxu0 0.0
        %981 = vmatpush1.msra.mxu0 %v953
        %982 = vmatprep.subr.mxu0 0.0
        %983 = vmatpush1.msra.mxu0 %v954
        %984 = vmatprep.subr.mxu0 0.0
        %985 = vmatpush1.msra.mxu0 %v955
        %986 = vmatprep.subr.mxu0 0.0
        %987 = vmatpush1.msra.mxu0 %v956
        %988 = vmatprep.subr.mxu0 0.0
        %989 = vmatpush1.msra.mxu0 %v957
        %990 = vmatprep.subr.mxu0 0.0
        %991 = vmatpush1.msra.mxu0 0.0
        %992 = vmatprep.subr.mxu0 0.0
        %993 = vmatpush1.msra.mxu0 0.0
        %994 = vmatprep.subr.mxu0 0.0
        %995 = vmatpush1.msra.mxu0 0.0
        %996 = vmatprep.subr.mxu0 0.0
        %997 = vmatpush1.msra.mxu0 0.0
        %998 = vmatprep.subr.mxu0 0.0
        %999 = vmatpush1.msra.mxu0 0.0
        %1000 = vmatprep.subr.mxu0 0.0
        %1001 = vmatpush1.msra.mxu0 0.0
        %1002 = vmatprep.subr.mxu0 0.0
        %1003 = vmatpush1.msra.mxu0 0.0
        %1004 = vmatprep.subr.mxu0 0.0
        %1005 = vmatpush1.msra.mxu0 0.0
        %1006 = vmatprep.subr.mxu0 0.0
        %1007 = vmatpush1.msra.mxu0 0.0
        %1008 = vmatprep.subr.mxu0 0.0
        %1009 = vmatpush1.msra.mxu0 0.0
        %1010 = vmatprep.subr.mxu0 0.0
        %1011 = vmatpush1.msra.mxu0 0.0
        %1012 = vmatprep.subr.mxu0 0.0
        %1013 = vmatpush1.msra.mxu0 0.0
        %1014 = vmatprep.subr.mxu0 0.0
        %1015 = vmatpush1.msra.mxu0 0.0
        %1016 = vmatprep.subr.mxu0 0.0
        %1017 = vmatpush1.msra.mxu0 0.0
        %1018 = vmatprep.subr.mxu0 0.0
        %1019 = vmatpush1.msra.mxu0 0.0
        %1020 = vmatprep.subr.mxu0 0.0
        %1021 = vmatpush1.msra.mxu0 0.0
        %1022 = vmatprep.mubr.f32.mxu0 0.0
        %1023 = vmatmul.mubr.f32.gmra.mrb[0].mxu0 %v362
        %v1024 = vpop.f32.mrb[0].mxu0
        %v1025 = vadd.f32 0.0, %v1024
        %v1026 = vpop.f32.mrb[0].mxu0
        %1027 = vdwg.mxu0
        %1028 = vst.msk [vmem:[%s289] sm:$0xff] %vm423, %v1025
        %v1030 = vsel %vm423, %v942, 0
        %v1033 = vsel %vm423, %v943, 0
        %v1036 = vsel %vm423, %v944, 0
        %v1039 = vsel %vm423, %v945, 0
        %v1042 = vsel %vm423, %v946, 0
        %v1045 = vsel %vm423, %v947, 0
        %v1048 = vsel %vm423, %v948, 0
        %v1051 = vsel %vm423, %v949, 0
        %v1054 = vsel %vm423, %v950, 0
        %v1057 = vsel %vm423, %v951, 0
        %v1060 = vsel %vm423, %v952, 0
        %v1063 = vsel %vm423, %v953, 0
        %v1066 = vsel %vm423, %v954, 0
        %v1069 = vsel %vm423, %v955, 0
        %v1072 = vsel %vm423, %v956, 0
        %v1075 = vsel %vm423, %v957, 0
        %1077 = vmatprep.subr.mxu0 0.0
        %1078 = vmatpush1.msra.mxu0 1.0
        %1079 = vmatprep.subr.mxu0 0.0
        %1080 = vmatpush1.msra.mxu0 1.0
        %1081 = vmatprep.subr.mxu0 0.0
        %1082 = vmatpush1.msra.mxu0 1.0
        %1083 = vmatprep.subr.mxu0 0.0
        %1084 = vmatpush1.msra.mxu0 1.0
        %1085 = vmatprep.subr.mxu0 0.0
        %1086 = vmatpush1.msra.mxu0 1.0
        %1087 = vmatprep.subr.mxu0 0.0
        %1088 = vmatpush1.msra.mxu0 1.0
        %1089 = vmatprep.subr.mxu0 0.0
        %1090 = vmatpush1.msra.mxu0 1.0
        %1091 = vmatprep.subr.mxu0 0.0
        %1092 = vmatpush1.msra.mxu0 1.0
        %1093 = vmatprep.subr.mxu0 0.0
        %1094 = vmatpush1.msra.mxu0 0.0
        %1095 = vmatprep.subr.mxu0 0.0
        %1096 = vmatpush1.msra.mxu0 0.0
        %1097 = vmatprep.subr.mxu0 0.0
        %1098 = vmatpush1.msra.mxu0 0.0
        %1099 = vmatprep.subr.mxu0 0.0
        %1100 = vmatpush1.msra.mxu0 0.0
        %1101 = vmatprep.subr.mxu0 0.0
        %1102 = vmatpush1.msra.mxu0 0.0
        %1103 = vmatprep.subr.mxu0 0.0
        %1104 = vmatpush1.msra.mxu0 0.0
        %1105 = vmatprep.subr.mxu0 0.0
        %1106 = vmatpush1.msra.mxu0 0.0
        %1107 = vmatprep.subr.mxu0 0.0
        %1108 = vmatpush1.msra.mxu0 0.0
        %1109 = vmatprep.subr.mxu0 0.0
        %1110 = vmatpush1.msra.mxu0 0.0
        %1111 = vmatprep.subr.mxu0 0.0
        %1112 = vmatpush1.msra.mxu0 0.0
        %1113 = vmatprep.subr.mxu0 0.0
        %1114 = vmatpush1.msra.mxu0 0.0
        %1115 = vmatprep.subr.mxu0 0.0
        %1116 = vmatpush1.msra.mxu0 0.0
        %1117 = vmatprep.subr.mxu0 0.0
        %1118 = vmatpush1.msra.mxu0 0.0
        %1119 = vmatprep.subr.mxu0 0.0
        %1120 = vmatpush1.msra.mxu0 0.0
        %1121 = vmatprep.subr.mxu0 0.0
        %1122 = vmatpush1.msra.mxu0 0.0
        %1123 = vmatprep.subr.mxu0 0.0
        %1124 = vmatpush1.msra.mxu0 0.0
        %1125 = vmatprep.subr.mxu0 0.0
        %1126 = vmatpush1.msra.mxu0 0.0
        %1127 = vmatprep.subr.mxu0 0.0
        %1128 = vmatpush1.msra.mxu0 0.0
        %1129 = vmatprep.subr.mxu0 0.0
        %1130 = vmatpush1.msra.mxu0 0.0
        %1131 = vmatprep.subr.mxu0 0.0
        %1132 = vmatpush1.msra.mxu0 0.0
        %1133 = vmatprep.subr.mxu0 0.0
        %1134 = vmatpush1.msra.mxu0 0.0
        %1135 = vmatprep.subr.mxu0 0.0
        %1136 = vmatpush1.msra.mxu0 0.0
        %1137 = vmatprep.subr.mxu0 0.0
        %1138 = vmatpush1.msra.mxu0 0.0
        %1139 = vmatprep.subr.mxu0 0.0
        %1140 = vmatpush1.msra.mxu0 0.0
        %1141 = vmatprep.mubr.f32.mxu0 0.0
        %1142 = vmatmul.mubr.f32.gmra.mrb[0].mxu0 %v1030
        %v1143 = vpop.f32.mrb[0].mxu0
        %v1144 = vadd.f32 0.0, %v1143
        %v1145 = vpop.f32.mrb[0].mxu0
        %1146 = vmatprep.mubr.f32.mxu0 0.0
        %1147 = vmatmul.mubr.f32.gmra.mrb[0].mxu0 %v1033
        %v1148 = vpop.f32.mrb[0].mxu0
        %v1149 = vadd.f32 0.0, %v1148
        %v1150 = vpop.f32.mrb[0].mxu0
        %1151 = vmatprep.mubr.f32.mxu0 0.0
        %1152 = vmatmul.mubr.f32.gmra.mrb[0].mxu0 %v1036
        %v1153 = vpop.f32.mrb[0].mxu0
        %v1154 = vadd.f32 0.0, %v1153
        %v1155 = vpop.f32.mrb[0].mxu0
        %1156 = vmatprep.mubr.f32.mxu0 0.0
        %1157 = vmatmul.mubr.f32.gmra.mrb[0].mxu0 %v1039
        %v1158 = vpop.f32.mrb[0].mxu0
        %v1159 = vadd.f32 0.0, %v1158
        %v1160 = vpop.f32.mrb[0].mxu0
        %1161 = vmatprep.mubr.f32.mxu0 0.0
        %1162 = vmatmul.mubr.f32.gmra.mrb[0].mxu0 %v1042
        %v1163 = vpop.f32.mrb[0].mxu0
        %v1164 = vadd.f32 0.0, %v1163
        %v1165 = vpop.f32.mrb[0].mxu0
        %1166 = vmatprep.mubr.f32.mxu0 0.0
        %1167 = vmatmul.mubr.f32.gmra.mrb[0].mxu0 %v1045
        %v1168 = vpop.f32.mrb[0].mxu0
        %v1169 = vadd.f32 0.0, %v1168
        %v1170 = vpop.f32.mrb[0].mxu0
        %1171 = vmatprep.mubr.f32.mxu0 0.0
        %1172 = vmatmul.mubr.f32.gmra.mrb[0].mxu0 %v1048
        %v1173 = vpop.f32.mrb[0].mxu0
        %v1174 = vadd.f32 0.0, %v1173
        %v1175 = vpop.f32.mrb[0].mxu0
        %1176 = vmatprep.mubr.f32.mxu0 0.0
        %1177 = vmatmul.mubr.f32.gmra.mrb[0].mxu0 %v1051
        %v1178 = vpop.f32.mrb[0].mxu0
        %v1179 = vadd.f32 0.0, %v1178
        %v1180 = vpop.f32.mrb[0].mxu0
        %1181 = vmatprep.mubr.f32.mxu0 0.0
        %1182 = vmatmul.mubr.f32.gmra.mrb[0].mxu0 %v1054
        %v1183 = vpop.f32.mrb[0].mxu0
        %v1184 = vadd.f32 0.0, %v1183
        %v1185 = vpop.f32.mrb[0].mxu0
        %1186 = vmatprep.mubr.f32.mxu0 0.0
        %1187 = vmatmul.mubr.f32.gmra.mrb[0].mxu0 %v1057
        %v1188 = vpop.f32.mrb[0].mxu0
        %v1189 = vadd.f32 0.0, %v1188
        %v1190 = vpop.f32.mrb[0].mxu0
        %1191 = vmatprep.mubr.f32.mxu0 0.0
        %1192 = vmatmul.mubr.f32.gmra.mrb[0].mxu0 %v1060
        %v1193 = vpop.f32.mrb[0].mxu0
        %v1194 = vadd.f32 0.0, %v1193
        %v1195 = vpop.f32.mrb[0].mxu0
        %1196 = vmatprep.mubr.f32.mxu0 0.0
        %1197 = vmatmul.mubr.f32.gmra.mrb[0].mxu0 %v1063
        %v1198 = vpop.f32.mrb[0].mxu0
        %v1199 = vadd.f32 0.0, %v1198
        %v1200 = vpop.f32.mrb[0].mxu0
        %1201 = vmatprep.mubr.f32.mxu0 0.0
        %1202 = vmatmul.mubr.f32.gmra.mrb[0].mxu0 %v1066
        %v1203 = vpop.f32.mrb[0].mxu0
        %v1204 = vadd.f32 0.0, %v1203
        %v1205 = vpop.f32.mrb[0].mxu0
        %1206 = vmatprep.mubr.f32.mxu0 0.0
        %1207 = vmatmul.mubr.f32.gmra.mrb[0].mxu0 %v1069
        %v1208 = vpop.f32.mrb[0].mxu0
        %v1209 = vadd.f32 0.0, %v1208
        %v1210 = vpop.f32.mrb[0].mxu0
        %1211 = vmatprep.mubr.f32.mxu0 0.0
        %1212 = vmatmul.mubr.f32.gmra.mrb[0].mxu0 %v1072
        %v1213 = vpop.f32.mrb[0].mxu0
        %v1214 = vadd.f32 0.0, %v1213
        %v1215 = vpop.f32.mrb[0].mxu0
        %1216 = vmatprep.mubr.f32.mxu0 0.0
        %1217 = vmatmul.mubr.f32.gmra.mrb[0].mxu0 %v1075
        %v1218 = vpop.f32.mrb[0].mxu0
        %v1219 = vadd.f32 0.0, %v1218
        %v1220 = vpop.f32.mrb[0].mxu0
        %1221 = vdwg.mxu0
        %v1222 = vld [vmem:[%s336] sm:$0x1]
        %vm1223 = vcmask 516096
        %v1224 = vsel %vm1223, %v806, 0.0
        %1225 = vadd.xlane.f32.xlu0 %v1224
        %v1226 = vpop.xlane.xlu0 %1225
        %v1227 = vrot.slane %v1226, 4
        %v1228 = vadd.f32 %v1226, %v1227
        %v1229 = vrot.slane %v1228, 2
        %v1230 = vadd.f32 %v1228, %v1229
        %v1231 = vrot.slane %v1230, 1
        %v1232 = vadd.f32 %v1230, %v1231
        %s1233 = vtos %v1232
        %v1234 = vstv %s1233
        %v1235 = vadd.f32 %v1222, %v1234
        %vm1236 = vcmask 0
        %1237 = vst.msk [vmem:[%s336] sm:$0x1] %vm1236, %v1235
        %v1238 = vld [vmem:[%s345] sm:$0xff]
        %v1239 = vld [vmem:[%s345 + $0x8] sm:$0xff]
        %v1240 = vld [vmem:[%s345 + $0x10] sm:$0xff]
        %v1241 = vld [vmem:[%s345 + $0x18] sm:$0xff]
        %v1242 = vld [vmem:[%s345 + $0x20] sm:$0xff]
        %v1243 = vld [vmem:[%s345 + $0x28] sm:$0xff]
        %v1244 = vld [vmem:[%s345 + $0x30] sm:$0xff]
        %v1245 = vld [vmem:[%s345 + $0x38] sm:$0xff]
        %v1246 = vld [vmem:[%s345 + $0x40] sm:$0xff]
        %v1247 = vld [vmem:[%s345 + $0x48] sm:$0xff]
        %v1248 = vld [vmem:[%s345 + $0x50] sm:$0xff]
        %v1249 = vld [vmem:[%s345 + $0x58] sm:$0xff]
        %v1250 = vld [vmem:[%s345 + $0x60] sm:$0xff]
        %v1251 = vld [vmem:[%s345 + $0x68] sm:$0xff]
        %v1252 = vld [vmem:[%s345 + $0x70] sm:$0xff]
        %v1253 = vld [vmem:[%s345 + $0x78] sm:$0xff]
        %v1254 = vadd.f32 %v1238, %v1144
        %v1255 = vadd.f32 %v1239, %v1149
        %v1256 = vadd.f32 %v1240, %v1154
        %v1257 = vadd.f32 %v1241, %v1159
        %v1258 = vadd.f32 %v1242, %v1164
        %v1259 = vadd.f32 %v1243, %v1169
        %v1260 = vadd.f32 %v1244, %v1174
        %v1261 = vadd.f32 %v1245, %v1179
        %v1262 = vadd.f32 %v1246, %v1184
        %v1263 = vadd.f32 %v1247, %v1189
        %v1264 = vadd.f32 %v1248, %v1194
        %v1265 = vadd.f32 %v1249, %v1199
        %v1266 = vadd.f32 %v1250, %v1204
        %v1267 = vadd.f32 %v1251, %v1209
        %v1268 = vadd.f32 %v1252, %v1214
        %v1269 = vadd.f32 %v1253, %v1219
        %vm1270 = vcmask 7168
        %1271 = vst.msk [vmem:[%s345] sm:$0xff] %vm1270, %v1254
        %1272 = vst.msk [vmem:[%s345 + $0x8] sm:$0xff] %vm1270, %v1255
        %1273 = vst.msk [vmem:[%s345 + $0x10] sm:$0xff] %vm1270, %v1256
        %1274 = vst.msk [vmem:[%s345 + $0x18] sm:$0xff] %vm1270, %v1257
        %1275 = vst.msk [vmem:[%s345 + $0x20] sm:$0xff] %vm1270, %v1258
        %1276 = vst.msk [vmem:[%s345 + $0x28] sm:$0xff] %vm1270, %v1259
        %1277 = vst.msk [vmem:[%s345 + $0x30] sm:$0xff] %vm1270, %v1260
        %1278 = vst.msk [vmem:[%s345 + $0x38] sm:$0xff] %vm1270, %v1261
        %1279 = vst.msk [vmem:[%s345 + $0x40] sm:$0xff] %vm1270, %v1262
        %1280 = vst.msk [vmem:[%s345 + $0x48] sm:$0xff] %vm1270, %v1263
        %1281 = vst.msk [vmem:[%s345 + $0x50] sm:$0xff] %vm1270, %v1264
        %1282 = vst.msk [vmem:[%s345 + $0x58] sm:$0xff] %vm1270, %v1265
        %1283 = vst.msk [vmem:[%s345 + $0x60] sm:$0xff] %vm1270, %v1266
        %1284 = vst.msk [vmem:[%s345 + $0x68] sm:$0xff] %vm1270, %v1267
        %1285 = vst.msk [vmem:[%s345 + $0x70] sm:$0xff] %vm1270, %v1268
        %1286 = vst.msk [vmem:[%s345 + $0x78] sm:$0xff] %vm1270, %v1269
        %s1287 = sand.u32 %s133, 1
        %s1288 = scalar_lea.sflag [#allocation5], %s1287
        %s1289 = sand.u32 %s133, 1
        %s1290 = smul.addr %s1289, 8
        %s1291 = scalar_lea.vmem [#allocation4], %s1290
        %p1292 = scmp.lt.s32.totalorder %s25, 1
        %s1293 = scalar_select %p1292, %s25, 1
        %p1294 = scmp.lt.s32.totalorder %s26, 1
        %s1295 = scalar_select %p1294, %s26, 1
        %s1296 = smul.addr %s1293, 2
        %s1297 = sadd.s32 %s1295, %s1296
        %s1298 = scalar_lea.vmem %s4, %s1297
        %p1299 = scmp.lt.s32.totalorder %s25, 1
        %s1300 = scalar_select %p1299, %s25, 1
        %p1301 = scmp.lt.s32.totalorder %s26, 1
        %s1302 = scalar_select %p1301, %s26, 1
        %s1303 = smul.addr %s1302, 16
        %s1304 = smul.addr %s1300, 32
        %s1305 = sadd.s32 %s1303, %s1304
        %s1306 = smul.addr %s1305, 8
        %s1307 = scalar_lea.vmem %s5, %s1306
        // Predicated region
        $region37: #{tpu_custom_call.1} parent=31 // pred_check
          %p1308 = pneg %p143
        $region38: #{tpu_custom_call.1} parent=31 // pred_check_branch
          %1310 = sbr.rel (%p1308) target = $region40
        $region39: #{tpu_custom_call.1} parent=31 // pred_region
          %s1312 = ssub.s32 128, 128
          %1313 = vsyncadd %s1288, %s1312
          %s1314 = sadd.s32 %s27, %s25
          %s1315 = smul.addr %s26, 2
          %s1316 = sadd.s32 %s1314, %s1315
          %s1317 = smul.addr %s1316, 128
          %s1318 = scalar_lea.hbm %s3, %s1317
          %s1320 = sshll.u32 %s1291, 4
          %s1321 = int_to_ptr.vmem [resolvable:$true] %s1320
          %1323 = dma.vmem_to_hbm [thread:$0]  %s1321, 128, %s1318, %s1288
        $region40: #{tpu_custom_call.1} parent=31 // pred_fallthru
          _
        // Predicated region
        $region41: #{tpu_custom_call.1} parent=31 // pred_check
          %p1324 = pneg %p171
        $region42: #{tpu_custom_call.1} parent=31 // pred_check_branch
          %1326 = sbr.rel (%p1324) target = $region44
        $region43: #{tpu_custom_call.1} parent=31 // pred_region
          _
        $region44: #{tpu_custom_call.1} parent=31 // pred_fallthru
          _
        // Predicated region
        $region45: #{tpu_custom_call.1} parent=31 // pred_check
          %p1327 = pneg %p199
        $region46: #{tpu_custom_call.1} parent=31 // pred_check_branch
          %1329 = sbr.rel (%p1327) target = $region48
        $region47: #{tpu_custom_call.1} parent=31 // pred_region
          _
        $region48: #{tpu_custom_call.1} parent=31 // pred_fallthru
          _
      $region32: #{tpu_custom_call.1} parent=5 // pred_fallthru
        _
      %p1330 = scmp.le.s32.totalorder 2, %s15
      // Predicated region
      $region49: #{tpu_custom_call.1} parent=5 // pred_check
        %p1331 = pneg %p1330
      $region50: #{tpu_custom_call.1} parent=5 // pred_check_branch
        %1333 = sbr.rel (%p1331) target = $region52
      $region51: #{tpu_custom_call.1} parent=5 // pred_region
        %s1334 = ssub.s32 %s15, 2
        // Predicated region
        $region53: #{tpu_custom_call.1} parent=51 // pred_check
          %p1335 = pneg %p149
        $region54: #{tpu_custom_call.1} parent=51 // pred_check_branch
          %1337 = sbr.rel (%p1335) target = $region56
        $region55: #{tpu_custom_call.1} parent=51 // pred_region
          %s1338 = sand.u32 %s134, 1
          %s1339 = scalar_lea.sflag [#allocation5], %s1338
          %s1340 = sand.u32 %s134, 1
          %s1341 = smul.addr %s1340, 8
          %s1342 = scalar_lea.vmem [#allocation4], %s1341
          %1343 = dma.done %s1339, 128
        $region56: #{tpu_custom_call.1} parent=51 // pred_fallthru
          _
        // Predicated region
        $region57: #{tpu_custom_call.1} parent=51 // pred_check
          %p1344 = pneg %p177
        $region58: #{tpu_custom_call.1} parent=51 // pred_check_branch
          %1346 = sbr.rel (%p1344) target = $region60
        $region59: #{tpu_custom_call.1} parent=51 // pred_region
          %p1347 = scmp.lt.s32.totalorder %s28, 1
          %s1348 = scalar_select %p1347, %s28, 1
          %p1349 = scmp.lt.s32.totalorder %s29, 1
          %s1350 = scalar_select %p1349, %s29, 1
          %s1351 = smul.addr %s1348, 2
          %s1352 = sadd.s32 %s1350, %s1351
          %s1353 = scalar_lea.vmem %s4, %s1352
        $region60: #{tpu_custom_call.1} parent=51 // pred_fallthru
          _
        // Predicated region
        $region61: #{tpu_custom_call.1} parent=51 // pred_check
          %p1354 = pneg %p205
        $region62: #{tpu_custom_call.1} parent=51 // pred_check_branch
          %1356 = sbr.rel (%p1354) target = $region64
        $region63: #{tpu_custom_call.1} parent=51 // pred_region
          %p1357 = scmp.lt.s32.totalorder %s28, 1
          %s1358 = scalar_select %p1357, %s28, 1
          %p1359 = scmp.lt.s32.totalorder %s29, 1
          %s1360 = scalar_select %p1359, %s29, 1
          %s1361 = smul.addr %s1360, 16
          %s1362 = smul.addr %s1358, 32
          %s1363 = sadd.s32 %s1361, %s1362
          %s1364 = smul.addr %s1363, 8
          %s1365 = scalar_lea.vmem %s5, %s1364
        $region64: #{tpu_custom_call.1} parent=51 // pred_fallthru
          _
      $region52: #{tpu_custom_call.1} parent=5 // pred_fallthru
        _
    $region6: #{tpu_custom_call.1} parent=1 // loop_footer
      %s19 = sadd.s32 1, %s15
    $region7: #{tpu_custom_call.1} parent=1 // loop_footer_branch
      %14 = sbr.rel target = $region3
    $region8: #{tpu_custom_call.1} parent=1 // loop_exit
      _
    %1366 = vsyncpa [#allocation5], 1
    %s1367 = scalar_lea.sflag [#allocation5], 1
    %1368 = vsyncpa %s1367, 1

</llo_original>
